<compile_context>
chip_gen: v6e
topology: v6e:2x2x1
jax: 0.10.0
libtpu: 0.0.40
codegen_flags: <defaults>
</compile_context>

<pallas_src>
import jax
import jax.numpy as jnp
from jax.experimental import pallas as pl
from jax.experimental.pallas import tpu as pltpu


def _round_up(n, m):
    return (n + m - 1) // m * m


def _encode_kernel(in_ref, w1_ref, b1_ref, w2_ref, b2_ref, wh_ref, bh_ref,
                   out_ref):
    """Full encoder hot path for one batch tile (3 MXU matmuls + VPU epilogue)."""
    cdt = w1_ref.dtype  # compute dtype (bf16 or f32); inputs already cast on host

    # fc1 + bias + relu.  Accumulate in f32 on the MXU; epilogue stays f32
    # (portable to v5e's f32-only VALU), cast back to the compute dtype only
    # when feeding the next matmul.
    h1 = jnp.dot(in_ref[...], w1_ref[...], preferred_element_type=jnp.float32)
    h1 = jnp.maximum(h1 + b1_ref[...], 0.0).astype(cdt)

    # fc2 + bias + relu.
    h2 = jnp.dot(h1, w2_ref[...], preferred_element_type=jnp.float32)
    h2 = jnp.maximum(h2 + b2_ref[...], 0.0).astype(cdt)

    # Fused heads (fc31 | fc32): one matmul, one lane-dense (tb, 2*Lp) store.
    out = jnp.dot(h2, wh_ref[...], preferred_element_type=jnp.float32)
    out_ref[...] = (out + bh_ref[...]).astype(out_ref.dtype)


def prepare_params(params, *, compute_dtype=jnp.bfloat16):
    """One-time host-side prep: fuse heads, pad to TPU tiles, cast weights."""
    w1, b1 = params["w1"], params["b1"]      # (F+C, H), (1, H)
    w2, b2 = params["w2"], params["b2"]      # (H, H),   (1, H)
    w31, b31 = params["w31"], params["b31"]  # (H, L),   (1, L)
    w32, b32 = params["w32"], params["b32"]  # (H, L),   (1, L)

    din, H = w1.shape
    L = w31.shape[1]
    Hp = _round_up(H, 128)      # hidden dim -> full lane width
    Lp = _round_up(L, 64)       # per-head pad so 2*Lp is a multiple of 128

    def pad(a, rows, cols):
        return jnp.pad(a, ((0, rows - a.shape[0]), (0, cols - a.shape[1])))

    w1p = pad(w1, din, Hp).astype(compute_dtype)                   # (F+C, Hp)
    w2p = pad(w2, Hp, Hp).astype(compute_dtype)                    # (Hp, Hp)
    wh = jnp.concatenate([pad(w31, Hp, Lp), pad(w32, Hp, Lp)],
                         axis=1).astype(compute_dtype)             # (Hp, 2*Lp)
    b1p = pad(b1, 1, Hp).astype(jnp.float32)
    b2p = pad(b2, 1, Hp).astype(jnp.float32)
    bh = jnp.concatenate([pad(b31, 1, Lp), pad(b32, 1, Lp)],
                         axis=1).astype(jnp.float32)               # (1, 2*Lp)

    return dict(w1=w1p, b1=b1p, w2=w2p, b2=b2p, wh=wh, bh=bh,
                latent_size=L, latent_pad=Lp)


def iwae_encode(x, c, kparams, *, tile_b=None):
    """Pallas-backed BaseIWAE.encode. Returns (z_mu, z_logvar)."""
    cdt = kparams["w1"].dtype
    cbytes = jnp.dtype(cdt).itemsize
    L = kparams["latent_size"]
    Lp = kparams["latent_pad"]
    Hp = kparams["w2"].shape[0]

    # Host-side concat fused with the dtype cast: the per-step DMA stream is
    # already in the compute dtype (halves input HBM bytes for bf16).
    inp = x if c is None else jnp.concatenate([x, c], axis=1)
    inp = inp.astype(cdt)
    B, Fc = inp.shape

    # Batch tile: multiple of 8 sublanes.  Default 256 amortizes per-step
    # overhead + a full 256-wide MXU pass (v6e/v7x) and keeps >=2 grid steps
    # for realistic batches so the "parallel" axis shards across v7x's 2 TCs.
    # On single-TC v5e/v6e, pass a larger tile_b (even the whole batch).
    if tile_b is None:
        tile_b = min(_round_up(B, 8), 256)
    tb = tile_b
    assert tb % 8 == 0
    Bp = _round_up(B, tb)
    if Bp != B:
        inp = jnp.pad(inp, ((0, Bp - B), (0, 0)))

    grid = (Bp // tb,)
    weight_names = ("w1", "b1", "w2", "b2", "wh", "bh")
    weight_arrays = [kparams[k] for k in weight_names]

    # Advisory cost estimate (3 matmuls per row + bias/relu epilogues).
    flops = 2 * Bp * (Fc * Hp + Hp * Hp + Hp * 2 * Lp)
    bytes_accessed = (
        Bp * Fc * cbytes                                    # input stream
        + (Fc * Hp + Hp * Hp + Hp * 2 * Lp) * cbytes        # weights (once)
        + (2 * Hp + 2 * Lp) * 4                             # biases
        + Bp * 2 * Lp * 4)                                  # output stream
    cost = pl.CostEstimate(flops=flops, transcendentals=0,
                           bytes_accessed=bytes_accessed)

    def run(single_buffer_weights):
        def wspec(arr):
            shape = arr.shape
            idx = lambda i: (0,) * len(shape)
            if single_buffer_weights:
                # Constant index_map -> double-buffering buys nothing; single
                # buffer halves weight-resident VMEM (key on v7x 64 MiB/TC).
                return pl.BlockSpec(shape, idx, pipeline_mode=pl.Buffered(1))
            return pl.BlockSpec(shape, idx)

        in_specs = ([pl.BlockSpec((tb, Fc), lambda i: (i, 0))]
                    + [wspec(a) for a in weight_arrays])
        out_spec = pl.BlockSpec((tb, 2 * Lp), lambda i: (i, 0))

        # Explicit scoped-VMEM budget: double-buffered activation streams,
        # single/double-buffered weights, plus f32 intermediates; 2x headroom.
        wbuf = 1 if single_buffer_weights else 2
        vmem_est = (
            2 * tb * Fc * cbytes                              # input x2 bufs
            + 2 * tb * 2 * Lp * 4                             # output x2 bufs
            + wbuf * (Fc * Hp + Hp * Hp + Hp * 2 * Lp) * cbytes
            + wbuf * (2 * Hp + 2 * Lp) * 4                    # biases
            + 2 * tb * Hp * 4 + tb * 2 * Lp * 4)              # f32 live temps
        vmem_limit = int(min(max(2 * vmem_est, 8 << 20), 64 << 20))

        out = pl.pallas_call(
            _encode_kernel,
            out_shape=jax.ShapeDtypeStruct((Bp, 2 * Lp), jnp.float32),
            grid_spec=pltpu.PrefetchScalarGridSpec(
                num_scalar_prefetch=0,
                grid=grid,
                in_specs=in_specs,
                out_specs=out_spec,
            ),
            compiler_params=pltpu.CompilerParams(
                dimension_semantics=("parallel",),
                vmem_limit_bytes=vmem_limit),
            cost_estimate=cost,
        )(inp, *weight_arrays)
        return jax.block_until_ready(out)

    try:
        out = run(True)
    except Exception:
        # Fallback for jax builds that reject Buffered(1) on BlockSpec inputs.
        out = run(False)

    z_mu = out[:B, :L]
    z_logvar = out[:B, Lp:Lp + L]
    return z_mu, z_logvar


def init_params(key, feature_size, class_size, hidden_size, latent_size):
    """Deterministic init mimicking nn.Linear shapes; stored as (in, out)."""
    ks = jax.random.split(key, 8)

    def lin(kw, kb, fan_in, fan_out):
        bound = 1.0 / jnp.sqrt(jnp.float32(fan_in))
        w = jax.random.uniform(kw, (fan_in, fan_out), jnp.float32, -bound, bound)
        b = jax.random.uniform(kb, (1, fan_out), jnp.float32, -bound, bound)
        return w, b

    din = feature_size + class_size
    w1, b1 = lin(ks[0], ks[1], din, hidden_size)
    w2, b2 = lin(ks[2], ks[3], hidden_size, hidden_size)
    w31, b31 = lin(ks[4], ks[5], hidden_size, latent_size)
    w32, b32 = lin(ks[6], ks[7], hidden_size, latent_size)
    return dict(w1=w1, b1=b1, w2=w2, b2=b2,
                w31=w31, b31=b31, w32=w32, b32=b32)


def _reference_encode(x, c, p):
    inp = jnp.concatenate([x, c], axis=1)
    h1 = jnp.maximum(inp @ p["w1"] + p["b1"], 0.0)
    h2 = jnp.maximum(h1 @ p["w2"] + p["b2"], 0.0)
    return h2 @ p["w31"] + p["b31"], h2 @ p["w32"] + p["b32"]


if __name__ == "__main__":
    # Small shapes consistent with BaseIWAE(feature_size, latent_size,
    # class_size, hidden_size, num_samples); batch big enough to exercise
    # multi-step tiling (tile_b=128 -> grid=(2,)).
    feature_size, latent_size, class_size, hidden_size, num_samples = 16, 8, 4, 32, 5
    batch = 256

    key = jax.random.PRNGKey(0)
    kx, kc, kp = jax.random.split(key, 3)
    x = jax.random.normal(kx, (batch, feature_size), jnp.float32)
    c = jax.random.normal(kc, (batch, class_size), jnp.float32)
    params = init_params(kp, feature_size, class_size, hidden_size, latent_size)

    ref_mu, ref_logvar = _reference_encode(x, c, params)

    # f32 compute path, multi-step grid: tight numerical check vs pure JAX.
    kp_f32 = prepare_params(params, compute_dtype=jnp.float32)
    mu32, lv32 = iwae_encode(x, c, kp_f32, tile_b=128)
    mu32, lv32 = jax.block_until_ready((mu32, lv32))
    assert mu32.shape == (batch, latent_size)
    assert lv32.shape == (batch, latent_size)
    assert jnp.allclose(mu32, ref_mu, atol=1e-4, rtol=1e-4)
    assert jnp.allclose(lv32, ref_logvar, atol=1e-4, rtol=1e-4)

    # bf16 weights/activations (cast on host) with f32 accumulation: loose check.
    kp_bf16 = prepare_params(params, compute_dtype=jnp.bfloat16)
    mubf, lvbf = iwae_encode(x, c, kp_bf16)   # default tile_b (=256, one step)
    mubf, lvbf = jax.block_until_ready((mubf, lvbf))
    assert jnp.allclose(mubf, ref_mu, atol=3e-2, rtol=3e-2)
    assert jnp.allclose(lvbf, ref_logvar, atol=3e-2, rtol=3e-2)

    print("KERNEL_OK")
</pallas_src>

<mosaic_0001>
module attributes {stable_mosaic.version = 11 : i64} {
  func.func @_encode_kernel(%arg0: i32, %arg1: memref<128x20xf32, #tpu.memory_space<vmem>>, %arg2: memref<20x128xf32, #tpu.memory_space<vmem>>, %arg3: memref<1x128xf32, #tpu.memory_space<vmem>>, %arg4: memref<128x128xf32, #tpu.memory_space<vmem>>, %arg5: memref<1x128xf32, #tpu.memory_space<vmem>>, %arg6: memref<128x128xf32, #tpu.memory_space<vmem>>, %arg7: memref<1x128xf32, #tpu.memory_space<vmem>>, %arg8: memref<128x128xf32, #tpu.memory_space<vmem>>) attributes {dimension_semantics = [#tpu.dimension_semantics<parallel>], iteration_bounds = array<i64: 2>, scalar_prefetch = 0 : i64, scratch_operands = 0 : i64, tpu.core_type = #tpu.core_type<tc>, window_params = [{transform_indices = @transform_0, window_bounds = array<i64: 128, 20>}, {pipeline_mode = #tpu.pipeline_mode<synchronous>, transform_indices = @transform_1, window_bounds = array<i64: 20, 128>}, {pipeline_mode = #tpu.pipeline_mode<synchronous>, transform_indices = @transform_2, window_bounds = array<i64: 1, 128>}, {pipeline_mode = #tpu.pipeline_mode<synchronous>, transform_indices = @transform_3, window_bounds = array<i64: 128, 128>}, {pipeline_mode = #tpu.pipeline_mode<synchronous>, transform_indices = @transform_4, window_bounds = array<i64: 1, 128>}, {pipeline_mode = #tpu.pipeline_mode<synchronous>, transform_indices = @transform_5, window_bounds = array<i64: 128, 128>}, {pipeline_mode = #tpu.pipeline_mode<synchronous>, transform_indices = @transform_6, window_bounds = array<i64: 1, 128>}, {transform_indices = @transform_7, window_bounds = array<i64: 128, 128>}]} {
    %c0 = arith.constant 0 : index
    %c0_0 = arith.constant 0 : index
    %0 = vector.load %arg1[%c0, %c0_0] : memref<128x20xf32, #tpu.memory_space<vmem>>, vector<128x20xf32>
    %c0_1 = arith.constant 0 : index
    %c0_2 = arith.constant 0 : index
    %1 = vector.load %arg2[%c0_1, %c0_2] : memref<20x128xf32, #tpu.memory_space<vmem>>, vector<20x128xf32>
    %cst = arith.constant dense<0.000000e+00> : vector<128x128xf32>
    %2 = tpu.matmul %0, %1, %cst {dimension_numbers = #tpu.dot_dimension_numbers<[1], [0], [0], [1], [0, 0, 1, 1], [], []>} : vector<128x20xf32>, vector<20x128xf32>, vector<128x128xf32> -> vector<128x128xf32>
    %c0_3 = arith.constant 0 : index
    %c0_4 = arith.constant 0 : index
    %3 = vector.load %arg3[%c0_3, %c0_4] : memref<1x128xf32, #tpu.memory_space<vmem>>, vector<1x128xf32>
    %4 = vector.broadcast %3 : vector<1x128xf32> to vector<128x128xf32>
    %5 = arith.addf %2, %4 : vector<128x128xf32>
    %cst_5 = arith.constant 0.000000e+00 : f32
    %6 = vector.broadcast %cst_5 : f32 to vector<128x128xf32>
    %7 = arith.maximumf %5, %6 : vector<128x128xf32>
    %c0_6 = arith.constant 0 : index
    %c0_7 = arith.constant 0 : index
    %8 = vector.load %arg4[%c0_6, %c0_7] : memref<128x128xf32, #tpu.memory_space<vmem>>, vector<128x128xf32>
    %cst_8 = arith.constant dense<0.000000e+00> : vector<128x128xf32>
    %9 = tpu.matmul %7, %8, %cst_8 {dimension_numbers = #tpu.dot_dimension_numbers<[1], [0], [0], [1], [0, 0, 1, 1], [], []>} : vector<128x128xf32>, vector<128x128xf32>, vector<128x128xf32> -> vector<128x128xf32>
    %c0_9 = arith.constant 0 : index
    %c0_10 = arith.constant 0 : index
    %10 = vector.load %arg5[%c0_9, %c0_10] : memref<1x128xf32, #tpu.memory_space<vmem>>, vector<1x128xf32>
    %11 = vector.broadcast %10 : vector<1x128xf32> to vector<128x128xf32>
    %12 = arith.addf %9, %11 : vector<128x128xf32>
    %cst_11 = arith.constant 0.000000e+00 : f32
    %13 = vector.broadcast %cst_11 : f32 to vector<128x128xf32>
    %14 = arith.maximumf %12, %13 : vector<128x128xf32>
    %c0_12 = arith.constant 0 : index
    %c0_13 = arith.constant 0 : index
    %15 = vector.load %arg6[%c0_12, %c0_13] : memref<128x128xf32, #tpu.memory_space<vmem>>, vector<128x128xf32>
    %cst_14 = arith.constant dense<0.000000e+00> : vector<128x128xf32>
    %16 = tpu.matmul %14, %15, %cst_14 {dimension_numbers = #tpu.dot_dimension_numbers<[1], [0], [0], [1], [0, 0, 1, 1], [], []>} : vector<128x128xf32>, vector<128x128xf32>, vector<128x128xf32> -> vector<128x128xf32>
    %c0_15 = arith.constant 0 : index
    %c0_16 = arith.constant 0 : index
    %17 = vector.load %arg7[%c0_15, %c0_16] : memref<1x128xf32, #tpu.memory_space<vmem>>, vector<1x128xf32>
    %18 = vector.broadcast %17 : vector<1x128xf32> to vector<128x128xf32>
    %19 = arith.addf %16, %18 : vector<128x128xf32>
    %c0_17 = arith.constant 0 : index
    %c0_18 = arith.constant 0 : index
    %20 = vector.load %arg8[%c0_17, %c0_18] : memref<128x128xf32, #tpu.memory_space<vmem>>, vector<128x128xf32>
    tpu.vector_store %arg8[%c0_17, %c0_18], %19 {strides = array<i32>} : memref<128x128xf32, #tpu.memory_space<vmem>>, vector<128x128xf32>,
    return
  }
  func.func @transform_0(%arg0: i32) -> (i32, i32) {
    %c0_i32 = arith.constant 0 : i32
    %c0_i32_0 = arith.constant 0 : i32
    return %arg0, %c0_i32 : i32, i32
  }
  func.func @transform_1(%arg0: i32) -> (i32, i32) {
    %c0_i32 = arith.constant 0 : i32
    %c0_i32_0 = arith.constant 0 : i32
    %c0_i32_1 = arith.constant 0 : i32
    return %c0_i32, %c0_i32_0 : i32, i32
  }
  func.func @transform_2(%arg0: i32) -> (i32, i32) {
    %c0_i32 = arith.constant 0 : i32
    %c0_i32_0 = arith.constant 0 : i32
    %c0_i32_1 = arith.constant 0 : i32
    return %c0_i32, %c0_i32_0 : i32, i32
  }
  func.func @transform_3(%arg0: i32) -> (i32, i32) {
    %c0_i32 = arith.constant 0 : i32
    %c0_i32_0 = arith.constant 0 : i32
    %c0_i32_1 = arith.constant 0 : i32
    return %c0_i32, %c0_i32_0 : i32, i32
  }
  func.func @transform_4(%arg0: i32) -> (i32, i32) {
    %c0_i32 = arith.constant 0 : i32
    %c0_i32_0 = arith.constant 0 : i32
    %c0_i32_1 = arith.constant 0 : i32
    return %c0_i32, %c0_i32_0 : i32, i32
  }
  func.func @transform_5(%arg0: i32) -> (i32, i32) {
    %c0_i32 = arith.constant 0 : i32
    %c0_i32_0 = arith.constant 0 : i32
    %c0_i32_1 = arith.constant 0 : i32
    return %c0_i32, %c0_i32_0 : i32, i32
  }
  func.func @transform_6(%arg0: i32) -> (i32, i32) {
    %c0_i32 = arith.constant 0 : i32
    %c0_i32_0 = arith.constant 0 : i32
    %c0_i32_1 = arith.constant 0 : i32
    return %c0_i32, %c0_i32_0 : i32, i32
  }
  func.func @transform_7(%arg0: i32) -> (i32, i32) {
    %c0_i32 = arith.constant 0 : i32
    %c0_i32_0 = arith.constant 0 : i32
    return %arg0, %c0_i32 : i32, i32
  }
}

module attributes {stable_mosaic.version = 11 : i64} {
  func.func @_encode_kernel(%arg0: i32, %arg1: memref<128x20xf32, #tpu.memory_space<vmem>>, %arg2: memref<20x128xf32, #tpu.memory_space<vmem>>, %arg3: memref<1x128xf32, #tpu.memory_space<vmem>>, %arg4: memref<128x128xf32, #tpu.memory_space<vmem>>, %arg5: memref<1x128xf32, #tpu.memory_space<vmem>>, %arg6: memref<128x128xf32, #tpu.memory_space<vmem>>, %arg7: memref<1x128xf32, #tpu.memory_space<vmem>>, %arg8: memref<128x128xf32, #tpu.memory_space<vmem>>) attributes {dimension_semantics = [#tpu.dimension_semantics<parallel>], iteration_bounds = array<i64: 2>, scalar_prefetch = 0 : i64, scratch_operands = 0 : i64, tpu.core_type = #tpu.core_type<tc>, window_params = [{transform_indices = @transform_0, window_bounds = array<i64: 128, 20>}, {pipeline_mode = #tpu.pipeline_mode<synchronous>, transform_indices = @transform_1, window_bounds = array<i64: 20, 128>}, {pipeline_mode = #tpu.pipeline_mode<synchronous>, transform_indices = @transform_2, window_bounds = array<i64: 1, 128>}, {pipeline_mode = #tpu.pipeline_mode<synchronous>, transform_indices = @transform_3, window_bounds = array<i64: 128, 128>}, {pipeline_mode = #tpu.pipeline_mode<synchronous>, transform_indices = @transform_4, window_bounds = array<i64: 1, 128>}, {pipeline_mode = #tpu.pipeline_mode<synchronous>, transform_indices = @transform_5, window_bounds = array<i64: 128, 128>}, {pipeline_mode = #tpu.pipeline_mode<synchronous>, transform_indices = @transform_6, window_bounds = array<i64: 1, 128>}, {transform_indices = @transform_7, window_bounds = array<i64: 128, 128>}]} {
    %c0 = arith.constant 0 : index
    %c0_0 = arith.constant 0 : index
    %0 = vector.load %arg1[%c0, %c0_0] : memref<128x20xf32, #tpu.memory_space<vmem>>, vector<128x20xf32>
    %c0_1 = arith.constant 0 : index
    %c0_2 = arith.constant 0 : index
    %1 = vector.load %arg2[%c0_1, %c0_2] : memref<20x128xf32, #tpu.memory_space<vmem>>, vector<20x128xf32>
    %cst = arith.constant dense<0.000000e+00> : vector<128x128xf32>
    %2 = tpu.matmul %0, %1, %cst {dimension_numbers = #tpu.dot_dimension_numbers<[1], [0], [0], [1], [0, 0, 1, 1], [], []>} : vector<128x20xf32>, vector<20x128xf32>, vector<128x128xf32> -> vector<128x128xf32>
    %c0_3 = arith.constant 0 : index
    %c0_4 = arith.constant 0 : index
    %3 = vector.load %arg3[%c0_3, %c0_4] : memref<1x128xf32, #tpu.memory_space<vmem>>, vector<1x128xf32>
    %4 = vector.broadcast %3 : vector<1x128xf32> to vector<128x128xf32>
    %5 = arith.addf %2, %4 : vector<128x128xf32>
    %cst_5 = arith.constant 0.000000e+00 : f32
    %6 = vector.broadcast %cst_5 : f32 to vector<128x128xf32>
    %7 = arith.maximumf %5, %6 : vector<128x128xf32>
    %c0_6 = arith.constant 0 : index
    %c0_7 = arith.constant 0 : index
    %8 = vector.load %arg4[%c0_6, %c0_7] : memref<128x128xf32, #tpu.memory_space<vmem>>, vector<128x128xf32>
    %cst_8 = arith.constant dense<0.000000e+00> : vector<128x128xf32>
    %9 = tpu.matmul %7, %8, %cst_8 {dimension_numbers = #tpu.dot_dimension_numbers<[1], [0], [0], [1], [0, 0, 1, 1], [], []>} : vector<128x128xf32>, vector<128x128xf32>, vector<128x128xf32> -> vector<128x128xf32>
    %c0_9 = arith.constant 0 : index
    %c0_10 = arith.constant 0 : index
    %10 = vector.load %arg5[%c0_9, %c0_10] : memref<1x128xf32, #tpu.memory_space<vmem>>, vector<1x128xf32>
    %11 = vector.broadcast %10 : vector<1x128xf32> to vector<128x128xf32>
    %12 = arith.addf %9, %11 : vector<128x128xf32>
    %cst_11 = arith.constant 0.000000e+00 : f32
    %13 = vector.broadcast %cst_11 : f32 to vector<128x128xf32>
    %14 = arith.maximumf %12, %13 : vector<128x128xf32>
    %c0_12 = arith.constant 0 : index
    %c0_13 = arith.constant 0 : index
    %15 = vector.load %arg6[%c0_12, %c0_13] : memref<128x128xf32, #tpu.memory_space<vmem>>, vector<128x128xf32>
    %cst_14 = arith.constant dense<0.000000e+00> : vector<128x128xf32>
    %16 = tpu.matmul %14, %15, %cst_14 {dimension_numbers = #tpu.dot_dimension_numbers<[1], [0], [0], [1], [0, 0, 1, 1], [], []>} : vector<128x128xf32>, vector<128x128xf32>, vector<128x128xf32> -> vector<128x128xf32>
    %c0_15 = arith.constant 0 : index
    %c0_16 = arith.constant 0 : index
    %17 = vector.load %arg7[%c0_15, %c0_16] : memref<1x128xf32, #tpu.memory_space<vmem>>, vector<1x128xf32>
    %18 = vector.broadcast %17 : vector<1x128xf32> to vector<128x128xf32>
    %19 = arith.addf %16, %18 : vector<128x128xf32>
    %c0_17 = arith.constant 0 : index
    %c0_18 = arith.constant 0 : index
    %20 = vector.load %arg8[%c0_17, %c0_18] : memref<128x128xf32, #tpu.memory_space<vmem>>, vector<128x128xf32>
    tpu.vector_store %arg8[%c0_17, %c0_18], %19 {strides = array<i32>} : memref<128x128xf32, #tpu.memory_space<vmem>>, vector<128x128xf32>,
    return
  }
  func.func @transform_0(%arg0: i32) -> (i32, i32) {
    %c0_i32 = arith.constant 0 : i32
    %c0_i32_0 = arith.constant 0 : i32
    return %arg0, %c0_i32 : i32, i32
  }
  func.func @transform_1(%arg0: i32) -> (i32, i32) {
    %c0_i32 = arith.constant 0 : i32
    %c0_i32_0 = arith.constant 0 : i32
    %c0_i32_1 = arith.constant 0 : i32
    return %c0_i32, %c0_i32_0 : i32, i32
  }
  func.func @transform_2(%arg0: i32) -> (i32, i32) {
    %c0_i32 = arith.constant 0 : i32
    %c0_i32_0 = arith.constant 0 : i32
    %c0_i32_1 = arith.constant 0 : i32
    return %c0_i32, %c0_i32_0 : i32, i32
  }
  func.func @transform_3(%arg0: i32) -> (i32, i32) {
    %c0_i32 = arith.constant 0 : i32
    %c0_i32_0 = arith.constant 0 : i32
    %c0_i32_1 = arith.constant 0 : i32
    return %c0_i32, %c0_i32_0 : i32, i32
  }
  func.func @transform_4(%arg0: i32) -> (i32, i32) {
    %c0_i32 = arith.constant 0 : i32
    %c0_i32_0 = arith.constant 0 : i32
    %c0_i32_1 = arith.constant 0 : i32
    return %c0_i32, %c0_i32_0 : i32, i32
  }
  func.func @transform_5(%arg0: i32) -> (i32, i32) {
    %c0_i32 = arith.constant 0 : i32
    %c0_i32_0 = arith.constant 0 : i32
    %c0_i32_1 = arith.constant 0 : i32
    return %c0_i32, %c0_i32_0 : i32, i32
  }
  func.func @transform_6(%arg0: i32) -> (i32, i32) {
    %c0_i32 = arith.constant 0 : i32
    %c0_i32_0 = arith.constant 0 : i32
    %c0_i32_1 = arith.constant 0 : i32
    return %c0_i32, %c0_i32_0 : i32, i32
  }
  func.func @transform_7(%arg0: i32) -> (i32, i32) {
    %c0_i32 = arith.constant 0 : i32
    %c0_i32_0 = arith.constant 0 : i32
    return %arg0, %c0_i32 : i32, i32
  }
}

</mosaic_0001>

<llo_original>
// kernel: tpu_custom_call.1
$region0: #{tpu_custom_call.1}
  #allocation0 [shape = 'u32[]', space=smem, size = 0x4, offset = 0x4, fixed_abs, tag = 'smem constant byte address 0x4 - core index']
  #allocation1 [shape = 'u32[144,128]{1,0:T(1,128)}', space=vmem, size = 0x12000, scoped, tag = 'internal scratch']
  %s0 = inlined_call_operand.vmem [shape: f32[256,20], index: 0, kind: input, shape index: {}]
  %s1 = inlined_call_operand.vmem [shape: f32[20,128], index: 1, kind: input, shape index: {}]
  %s2 = inlined_call_operand.vmem [shape: f32[1,128], index: 2, kind: input, shape index: {}]
  %s3 = inlined_call_operand.vmem [shape: f32[128,128], index: 3, kind: input, shape index: {}]
  %s4 = inlined_call_operand.vmem [shape: f32[1,128], index: 4, kind: input, shape index: {}]
  %s5 = inlined_call_operand.vmem [shape: f32[128,128], index: 5, kind: input, shape index: {}]
  %s6 = inlined_call_operand.vmem [shape: f32[1,128], index: 6, kind: input, shape index: {}]
  %s7 = inlined_call_operand.hbm [shape: f32[256,128], index: 7, kind: output, shape index: {}]
  %s8 = sld [smem:[#allocation0]]
  $region61: #{tpu_custom_call.1} parent=0
    _
  %s10 = ssub.s32 1, %s8
  %s11 = scalar_select 0, %s10, %s8
  $region1: #{tpu_custom_call.1} parent=0
    #allocation2 [shape = 'u8[131072]{0}', space=vmem, size = 0x20000, scoped, tag = 'output window, operand 0']
    #allocation3 [shape = 's32[2]{0}', space=sflag, size = 0x8, scoped, tag = 'scoped memory for tpu_custom_call.1']
    %12 = vsyncpa [#allocation3], 0
    %s13 = scalar_lea.sflag [#allocation3], 1
    %14 = vsyncpa %s13, 0
    loop: start=0, step=1, limit=4
    $region2: #{tpu_custom_call.1} parent=1 // loop_pre_header
      _
    $region3: #{tpu_custom_call.1} parent=1 // loop_header
      %s16 = sphi 0, %s20
      %p17 = scmp.ge.s32.totalorder %s16, 4
      %s26 = sphi 0, %s28
      %s29 = sphi 0, %s26
      %s30 = sphi 0, %s29
      %s46 = sphi 0, %s30
      %s50 = sphi 0, %s50
      %s52 = sphi 0, %s50
      %s53 = sphi 0, %s52
      %s67 = sphi 0, %s53
      %s71 = sphi 0, %s71
      %s73 = sphi 0, %s71
      %s74 = sphi 0, %s73
      %s88 = sphi 0, %s74
      %s92 = sphi 0, %s92
      %s94 = sphi 0, %s92
      %s95 = sphi 0, %s94
      %s109 = sphi 0, %s95
      %s113 = sphi 0, %s113
      %s115 = sphi 0, %s113
      %s116 = sphi 0, %s115
      %s130 = sphi 0, %s116
      %s134 = sphi 0, %s134
      %s136 = sphi 0, %s134
      %s137 = sphi 0, %s136
      %s151 = sphi 0, %s137
      %s155 = sphi 0, %s155
      %s157 = sphi 0, %s155
      %s158 = sphi 0, %s157
      %s172 = sphi 0, %s158
      %s178 = sphi 0, %s180
      %s181 = sphi 0, %s178
      %s182 = sphi 0, %s181
      %s198 = sphi 0, %s182
    $region4: #{tpu_custom_call.1} parent=1 // loop_header_branch
      %19 = sbr.rel (%p17) target = $region8
    $region5: #{tpu_custom_call.1} parent=1 // loop_body
      %s21 = ssub.s32 %s16, 1
      %s22 = ssub.s32 %s16, 2
      %s23 = sadd.s32 %s16, 1
      %s24 = ssub.s32 %s16, %s23
      %p25 = scmp.eq.s32.totalorder %s24, 0
      %s27 = sadd.s32 %s26, 1
      %s28 = scalar_select %p25, %s26, %s27
      %p31 = pneg %p25
      %p32 = scmp.eq.s32.totalorder %s16, 1
      %p33 = por %p31, %p32
      %p34 = scmp.ne.s32.totalorder %s26, %s29
      %p35 = scmp.eq.s32.totalorder %s16, 0
      %p36 = por %p34, %p35
      %p37 = scmp.ne.s32.totalorder %s26, %s29
      %p38 = scmp.eq.s32.totalorder %s21, 1
      %p39 = por %p37, %p38
      %p40 = scmp.ne.s32.totalorder %s29, %s30
      %p41 = scmp.eq.s32.totalorder %s21, 0
      %p42 = por %p40, %p41
      %p43 = scmp.ne.s32.totalorder %s29, %s30
      %p44 = scmp.eq.s32.totalorder %s22, 1
      %p45 = por %p43, %p44
      %p47 = scmp.ne.s32.totalorder %s30, %s46
      %p48 = scmp.eq.s32.totalorder %s22, 0
      %p49 = por %p47, %p48
      %s51 = sadd.s32 %s50, 1
      %p54 = scmp.eq.s32.totalorder %s16, 1
      %p55 = scmp.ne.s32.totalorder %s50, %s52
      %p56 = scmp.eq.s32.totalorder %s16, 0
      %p57 = por %p55, %p56
      %p58 = scmp.ne.s32.totalorder %s50, %s52
      %p59 = scmp.eq.s32.totalorder %s21, 1
      %p60 = por %p58, %p59
      %p61 = scmp.ne.s32.totalorder %s52, %s53
      %p62 = scmp.eq.s32.totalorder %s21, 0
      %p63 = por %p61, %p62
      %p64 = scmp.ne.s32.totalorder %s52, %s53
      %p65 = scmp.eq.s32.totalorder %s22, 1
      %p66 = por %p64, %p65
      %p68 = scmp.ne.s32.totalorder %s53, %s67
      %p69 = scmp.eq.s32.totalorder %s22, 0
      %p70 = por %p68, %p69
      %s72 = sadd.s32 %s71, 1
      %p75 = scmp.eq.s32.totalorder %s16, 1
      %p76 = scmp.ne.s32.totalorder %s71, %s73
      %p77 = scmp.eq.s32.totalorder %s16, 0
      %p78 = por %p76, %p77
      %p79 = scmp.ne.s32.totalorder %s71, %s73
      %p80 = scmp.eq.s32.totalorder %s21, 1
      %p81 = por %p79, %p80
      %p82 = scmp.ne.s32.totalorder %s73, %s74
      %p83 = scmp.eq.s32.totalorder %s21, 0
      %p84 = por %p82, %p83
      %p85 = scmp.ne.s32.totalorder %s73, %s74
      %p86 = scmp.eq.s32.totalorder %s22, 1
      %p87 = por %p85, %p86
      %p89 = scmp.ne.s32.totalorder %s74, %s88
      %p90 = scmp.eq.s32.totalorder %s22, 0
      %p91 = por %p89, %p90
      %s93 = sadd.s32 %s92, 1
      %p96 = scmp.eq.s32.totalorder %s16, 1
      %p97 = scmp.ne.s32.totalorder %s92, %s94
      %p98 = scmp.eq.s32.totalorder %s16, 0
      %p99 = por %p97, %p98
      %p100 = scmp.ne.s32.totalorder %s92, %s94
      %p101 = scmp.eq.s32.totalorder %s21, 1
      %p102 = por %p100, %p101
      %p103 = scmp.ne.s32.totalorder %s94, %s95
      %p104 = scmp.eq.s32.totalorder %s21, 0
      %p105 = por %p103, %p104
      %p106 = scmp.ne.s32.totalorder %s94, %s95
      %p107 = scmp.eq.s32.totalorder %s22, 1
      %p108 = por %p106, %p107
      %p110 = scmp.ne.s32.totalorder %s95, %s109
      %p111 = scmp.eq.s32.totalorder %s22, 0
      %p112 = por %p110, %p111
      %s114 = sadd.s32 %s113, 1
      %p117 = scmp.eq.s32.totalorder %s16, 1
      %p118 = scmp.ne.s32.totalorder %s113, %s115
      %p119 = scmp.eq.s32.totalorder %s16, 0
      %p120 = por %p118, %p119
      %p121 = scmp.ne.s32.totalorder %s113, %s115
      %p122 = scmp.eq.s32.totalorder %s21, 1
      %p123 = por %p121, %p122
      %p124 = scmp.ne.s32.totalorder %s115, %s116
      %p125 = scmp.eq.s32.totalorder %s21, 0
      %p126 = por %p124, %p125
      %p127 = scmp.ne.s32.totalorder %s115, %s116
      %p128 = scmp.eq.s32.totalorder %s22, 1
      %p129 = por %p127, %p128
      %p131 = scmp.ne.s32.totalorder %s116, %s130
      %p132 = scmp.eq.s32.totalorder %s22, 0
      %p133 = por %p131, %p132
      %s135 = sadd.s32 %s134, 1
      %p138 = scmp.eq.s32.totalorder %s16, 1
      %p139 = scmp.ne.s32.totalorder %s134, %s136
      %p140 = scmp.eq.s32.totalorder %s16, 0
      %p141 = por %p139, %p140
      %p142 = scmp.ne.s32.totalorder %s134, %s136
      %p143 = scmp.eq.s32.totalorder %s21, 1
      %p144 = por %p142, %p143
      %p145 = scmp.ne.s32.totalorder %s136, %s137
      %p146 = scmp.eq.s32.totalorder %s21, 0
      %p147 = por %p145, %p146
      %p148 = scmp.ne.s32.totalorder %s136, %s137
      %p149 = scmp.eq.s32.totalorder %s22, 1
      %p150 = por %p148, %p149
      %p152 = scmp.ne.s32.totalorder %s137, %s151
      %p153 = scmp.eq.s32.totalorder %s22, 0
      %p154 = por %p152, %p153
      %s156 = sadd.s32 %s155, 1
      %p159 = scmp.eq.s32.totalorder %s16, 1
      %p160 = scmp.ne.s32.totalorder %s155, %s157
      %p161 = scmp.eq.s32.totalorder %s16, 0
      %p162 = por %p160, %p161
      %p163 = scmp.ne.s32.totalorder %s155, %s157
      %p164 = scmp.eq.s32.totalorder %s21, 1
      %p165 = por %p163, %p164
      %p166 = scmp.ne.s32.totalorder %s157, %s158
      %p167 = scmp.eq.s32.totalorder %s21, 0
      %p168 = por %p166, %p167
      %p169 = scmp.ne.s32.totalorder %s157, %s158
      %p170 = scmp.eq.s32.totalorder %s22, 1
      %p171 = por %p169, %p170
      %p173 = scmp.ne.s32.totalorder %s158, %s172
      %p174 = scmp.eq.s32.totalorder %s22, 0
      %p175 = por %p173, %p174
      %s176 = ssub.s32 %s16, %s23
      %p177 = scmp.eq.s32.totalorder %s176, 0
      %s179 = sadd.s32 %s178, 1
      %s180 = scalar_select %p177, %s178, %s179
      %p183 = pneg %p177
      %p184 = scmp.eq.s32.totalorder %s16, 1
      %p185 = por %p183, %p184
      %p186 = scmp.ne.s32.totalorder %s178, %s181
      %p187 = scmp.eq.s32.totalorder %s16, 0
      %p188 = por %p186, %p187
      %p189 = scmp.ne.s32.totalorder %s178, %s181
      %p190 = scmp.eq.s32.totalorder %s21, 1
      %p191 = por %p189, %p190
      %p192 = scmp.ne.s32.totalorder %s181, %s182
      %p193 = scmp.eq.s32.totalorder %s21, 0
      %p194 = por %p192, %p193
      %p195 = scmp.ne.s32.totalorder %s181, %s182
      %p196 = scmp.eq.s32.totalorder %s22, 1
      %p197 = por %p195, %p196
      %p199 = scmp.ne.s32.totalorder %s182, %s198
      %p200 = scmp.eq.s32.totalorder %s22, 0
      %p201 = por %p199, %p200
      %p202 = scmp.le.s32.totalorder 1, %s16
      %p203 = scmp.lt.s32.totalorder %s16, 3
      %p204 = pnand %p202, %p203
      %p205 = pneg %p204
      // Predicated region
      $region9: #{tpu_custom_call.1} parent=5 // pred_check
        _
      $region10: #{tpu_custom_call.1} parent=5 // pred_check_branch
        %207 = sbr.rel (%p204) target = $region12
      $region11: #{tpu_custom_call.1} parent=5 // pred_region
        %s208 = ssub.s32 %s16, 1
        // Predicated region
        $region13: #{tpu_custom_call.1} parent=11 // pred_check
          %p209 = pneg %p63
        $region14: #{tpu_custom_call.1} parent=11 // pred_check_branch
          %211 = sbr.rel (%p209) target = $region16
        $region15: #{tpu_custom_call.1} parent=11 // pred_region
          _
        $region16: #{tpu_custom_call.1} parent=11 // pred_fallthru
          _
        // Predicated region
        $region17: #{tpu_custom_call.1} parent=11 // pred_check
          %p212 = pneg %p84
        $region18: #{tpu_custom_call.1} parent=11 // pred_check_branch
          %214 = sbr.rel (%p212) target = $region20
        $region19: #{tpu_custom_call.1} parent=11 // pred_region
          _
        $region20: #{tpu_custom_call.1} parent=11 // pred_fallthru
          _
        // Predicated region
        $region21: #{tpu_custom_call.1} parent=11 // pred_check
          %p215 = pneg %p105
        $region22: #{tpu_custom_call.1} parent=11 // pred_check_branch
          %217 = sbr.rel (%p215) target = $region24
        $region23: #{tpu_custom_call.1} parent=11 // pred_region
          _
        $region24: #{tpu_custom_call.1} parent=11 // pred_fallthru
          _
        // Predicated region
        $region25: #{tpu_custom_call.1} parent=11 // pred_check
          %p218 = pneg %p126
        $region26: #{tpu_custom_call.1} parent=11 // pred_check_branch
          %220 = sbr.rel (%p218) target = $region28
        $region27: #{tpu_custom_call.1} parent=11 // pred_region
          _
        $region28: #{tpu_custom_call.1} parent=11 // pred_fallthru
          _
        // Predicated region
        $region29: #{tpu_custom_call.1} parent=11 // pred_check
          %p221 = pneg %p147
        $region30: #{tpu_custom_call.1} parent=11 // pred_check_branch
          %223 = sbr.rel (%p221) target = $region32
        $region31: #{tpu_custom_call.1} parent=11 // pred_region
          _
        $region32: #{tpu_custom_call.1} parent=11 // pred_fallthru
          _
        // Predicated region
        $region33: #{tpu_custom_call.1} parent=11 // pred_check
          %p224 = pneg %p168
        $region34: #{tpu_custom_call.1} parent=11 // pred_check_branch
          %226 = sbr.rel (%p224) target = $region36
        $region35: #{tpu_custom_call.1} parent=11 // pred_region
          _
        $region36: #{tpu_custom_call.1} parent=11 // pred_fallthru
          _
      $region12: #{tpu_custom_call.1} parent=5 // pred_fallthru
        _
      %p227 = scmp.lt.s32.totalorder %s16, 2
      // Predicated region
      $region37: #{tpu_custom_call.1} parent=5 // pred_check
        %p228 = pneg %p227
      $region38: #{tpu_custom_call.1} parent=5 // pred_check_branch
        %230 = sbr.rel (%p228) target = $region40
      $region39: #{tpu_custom_call.1} parent=5 // pred_region
        // Predicated region
        $region41: #{tpu_custom_call.1} parent=39 // pred_check
          %p231 = pneg %p36
        $region42: #{tpu_custom_call.1} parent=39 // pred_check_branch
          %233 = sbr.rel (%p231) target = $region44
        $region43: #{tpu_custom_call.1} parent=39 // pred_region
          %s234 = smul.u32 16, %s16
          %p235 = scmp.lt.s32.totalorder %s234, 31
          %s236 = scalar_select %p235, %s234, 31
          %s237 = smul.addr %s236, 8
          %s238 = scalar_lea.vmem %s0, %s237
          %s239 = smul.u32 16, %s16
        $region44: #{tpu_custom_call.1} parent=39 // pred_fallthru
          _
      $region40: #{tpu_custom_call.1} parent=5 // pred_fallthru
        _
      %p240 = scmp.le.s32.totalorder 1, %s16
      %p241 = scmp.lt.s32.totalorder %s16, 3
      %p242 = pnand %p240, %p241
      %p243 = pneg %p242
      // Predicated region
      $region45: #{tpu_custom_call.1} parent=5 // pred_check
        _
      $region46: #{tpu_custom_call.1} parent=5 // pred_check_branch
        %245 = sbr.rel (%p242) target = $region48
      $region47: #{tpu_custom_call.1} parent=5 // pred_region
        %s246 = ssub.s32 %s16, 1
        %s247 = smul.u32 16, %s21
        %p248 = scmp.lt.s32.totalorder %s247, 31
        %s249 = scalar_select %p248, %s247, 31
        %s250 = smul.addr %s249, 8
        %s251 = scalar_lea.vmem %s0, %s250
        %p252 = pneg %p42
        %p253 = pneg %p39
        %p254 = pneg %p63
        %p255 = pneg %p60
        %p256 = pneg %p84
        %p257 = pneg %p81
        %p258 = pneg %p105
        %p259 = pneg %p102
        %p260 = pneg %p126
        %p261 = pneg %p123
        %p262 = pneg %p147
        %p263 = pneg %p144
        %p264 = pneg %p168
        %p265 = pneg %p165
        %p266 = pneg %p194
        %p267 = pneg %p191
        %s268 = sand.u32 %s181, 1
        %s269 = scalar_lea.sflag [#allocation3], %s268
        %s270 = sand.u32 %s181, 1
        %s271 = smul.addr %s270, 128
        %s272 = scalar_lea.vmem [#allocation2], %s271
        %s273 = smul.u32 16, %s21
        %p274 = scmp.lt.s32.totalorder %s273, 31
        %s275 = scalar_select %p274, %s273, 31
        %s276 = smul.addr %s275, 8
        %s277 = scalar_lea.vmem %s0, %s276
        %s278 = smul.u32 16, %s21
        %s279 = smul.u32 16, %s21
        %v280 = vld [vmem:[%s277] sm:$0xff]
        %v281 = vld [vmem:[%s277 + $0x8] sm:$0xff]
        %v282 = vld [vmem:[%s277 + $0x10] sm:$0xff]
        %v283 = vld [vmem:[%s277 + $0x18] sm:$0xff]
        %v284 = vld [vmem:[%s277 + $0x20] sm:$0xff]
        %v285 = vld [vmem:[%s277 + $0x28] sm:$0xff]
        %v286 = vld [vmem:[%s277 + $0x30] sm:$0xff]
        %v287 = vld [vmem:[%s277 + $0x38] sm:$0xff]
        %v288 = vld [vmem:[%s277 + $0x40] sm:$0xff]
        %v289 = vld [vmem:[%s277 + $0x48] sm:$0xff]
        %v290 = vld [vmem:[%s277 + $0x50] sm:$0xff]
        %v291 = vld [vmem:[%s277 + $0x58] sm:$0xff]
        %v292 = vld [vmem:[%s277 + $0x60] sm:$0xff]
        %v293 = vld [vmem:[%s277 + $0x68] sm:$0xff]
        %v294 = vld [vmem:[%s277 + $0x70] sm:$0xff]
        %v295 = vld [vmem:[%s277 + $0x78] sm:$0xff]
        %v296 = vld [vmem:[%s1] sm:$0xff]
        %v297 = vld [vmem:[%s1 + $0x8] sm:$0xff]
        %v298 = vld [vmem:[%s1 + $0x10] sm:$0xf]
        %v299 = vld [vmem:[%s2] sm:$0x1]
        %v301 = vlaneseq
        %v302 = vshrl.u32 %v301, 7
        %v303 = vsub.s32 0, %v302
        %v304 = vrot.slane %v299, %v303
        %vm306 = vcmask 162816
        %v308 = vsel %vm306, %v280, 0
        %v311 = vsel %vm306, %v281, 0
        %v314 = vsel %vm306, %v282, 0
        %v317 = vsel %vm306, %v283, 0
        %v320 = vsel %vm306, %v284, 0
        %v323 = vsel %vm306, %v285, 0
        %v326 = vsel %vm306, %v286, 0
        %v329 = vsel %vm306, %v287, 0
        %v332 = vsel %vm306, %v288, 0
        %v335 = vsel %vm306, %v289, 0
        %v338 = vsel %vm306, %v290, 0
        %v341 = vsel %vm306, %v291, 0
        %v344 = vsel %vm306, %v292, 0
        %v347 = vsel %vm306, %v293, 0
        %v350 = vsel %vm306, %v294, 0
        %v353 = vsel %vm306, %v295, 0
        %vm355 = vcmask 1043456
        %v357 = vsel %vm355, %v298, 0
        %359 = vmatprep.subr.mxu0 0.0
        %360 = vmatpush1.msra.mxu0 0.0
        %361 = vmatprep.subr.mxu0 0.0
        %362 = vmatpush1.msra.mxu0 0.0
        %363 = vmatprep.subr.mxu0 0.0
        %364 = vmatpush1.msra.mxu0 0.0
        %365 = vmatprep.subr.mxu0 0.0
        %366 = vmatpush1.msra.mxu0 0.0
        %367 = vmatprep.subr.mxu0 0.0
        %368 = vmatpush1.msra.mxu0 0.0
        %369 = vmatprep.subr.mxu0 0.0
        %370 = vmatpush1.msra.mxu0 0.0
        %371 = vmatprep.subr.mxu0 0.0
        %372 = vmatpush1.msra.mxu0 0.0
        %373 = vmatprep.subr.mxu0 0.0
        %374 = vmatpush1.msra.mxu0 0.0
        %375 = vmatprep.subr.mxu0 0.0
        %376 = vmatpush1.msra.mxu0 0.0
        %377 = vmatprep.subr.mxu0 0.0
        %378 = vmatpush1.msra.mxu0 0.0
        %379 = vmatprep.subr.mxu0 0.0
        %380 = vmatpush1.msra.mxu0 0.0
        %381 = vmatprep.subr.mxu0 0.0
        %382 = vmatpush1.msra.mxu0 0.0
        %383 = vmatprep.subr.mxu0 0.0
        %384 = vmatpush1.msra.mxu0 0.0
        %385 = vmatprep.subr.mxu0 0.0
        %386 = vmatpush1.msra.mxu0 %v357
        %387 = vmatprep.subr.mxu0 0.0
        %388 = vmatpush1.msra.mxu0 %v297
        %389 = vmatprep.subr.mxu0 0.0
        %390 = vmatpush1.msra.mxu0 %v296
        %391 = vmatprep.subr.mxu0 0.0
        %392 = vmatpush2.msra.mxu0 0.0
        %393 = vmatprep.subr.mxu0 0.0
        %394 = vmatpush2.msra.mxu0 0.0
        %395 = vmatprep.subr.mxu0 0.0
        %396 = vmatpush2.msra.mxu0 0.0
        %397 = vmatprep.subr.mxu0 0.0
        %398 = vmatpush2.msra.mxu0 0.0
        %399 = vmatprep.subr.mxu0 0.0
        %400 = vmatpush2.msra.mxu0 0.0
        %401 = vmatprep.subr.mxu0 0.0
        %402 = vmatpush2.msra.mxu0 0.0
        %403 = vmatprep.subr.mxu0 0.0
        %404 = vmatpush2.msra.mxu0 0.0
        %405 = vmatprep.subr.mxu0 0.0
        %406 = vmatpush2.msra.mxu0 0.0
        %407 = vmatprep.subr.mxu0 0.0
        %408 = vmatpush2.msra.mxu0 0.0
        %409 = vmatprep.subr.mxu0 0.0
        %410 = vmatpush2.msra.mxu0 0.0
        %411 = vmatprep.subr.mxu0 0.0
        %412 = vmatpush2.msra.mxu0 0.0
        %413 = vmatprep.subr.mxu0 0.0
        %414 = vmatpush2.msra.mxu0 0.0
        %415 = vmatprep.subr.mxu0 0.0
        %416 = vmatpush2.msra.mxu0 0.0
        %417 = vmatprep.subr.mxu0 0.0
        %418 = vmatpush2.msra.mxu0 0.0
        %419 = vmatprep.subr.mxu0 0.0
        %420 = vmatpush2.msra.mxu0 0.0
        %421 = vmatprep.subr.mxu0 0.0
        %422 = vmatpush2.msra.mxu0 0.0
        %423 = vmatprep.mubr.f32.mxu0 0.0
        %424 = vmatmul.mubr.f32.gmra.mxu0 %v308
        %v425 = vpop.f32.mrf.mxu0
        %v426 = vadd.f32 %v304, %v425
        %v427 = vpop.f32.mrf.mxu0
        %428 = vmatprep.mubr.f32.mxu0 0.0
        %429 = vmatmul.mubr.f32.gmra.mxu0 %v311
        %v430 = vpop.f32.mrf.mxu0
        %v431 = vadd.f32 %v304, %v430
        %v432 = vpop.f32.mrf.mxu0
        %433 = vmatprep.mubr.f32.mxu0 0.0
        %434 = vmatmul.mubr.f32.gmra.mxu0 %v314
        %v435 = vpop.f32.mrf.mxu0
        %v436 = vadd.f32 %v304, %v435
        %v437 = vpop.f32.mrf.mxu0
        %438 = vmatprep.mubr.f32.mxu0 0.0
        %439 = vmatmul.mubr.f32.gmra.mxu0 %v317
        %v440 = vpop.f32.mrf.mxu0
        %v441 = vadd.f32 %v304, %v440
        %v442 = vpop.f32.mrf.mxu0
        %443 = vmatprep.mubr.f32.mxu0 0.0
        %444 = vmatmul.mubr.f32.gmra.mxu0 %v320
        %v445 = vpop.f32.mrf.mxu0
        %v446 = vadd.f32 %v304, %v445
        %v447 = vpop.f32.mrf.mxu0
        %448 = vmatprep.mubr.f32.mxu0 0.0
        %449 = vmatmul.mubr.f32.gmra.mxu0 %v323
        %v450 = vpop.f32.mrf.mxu0
        %v451 = vadd.f32 %v304, %v450
        %v452 = vpop.f32.mrf.mxu0
        %453 = vmatprep.mubr.f32.mxu0 0.0
        %454 = vmatmul.mubr.f32.gmra.mxu0 %v326
        %v455 = vpop.f32.mrf.mxu0
        %v456 = vadd.f32 %v304, %v455
        %v457 = vpop.f32.mrf.mxu0
        %458 = vmatprep.mubr.f32.mxu0 0.0
        %459 = vmatmul.mubr.f32.gmra.mxu0 %v329
        %v460 = vpop.f32.mrf.mxu0
        %v461 = vadd.f32 %v304, %v460
        %v462 = vpop.f32.mrf.mxu0
        %463 = vmatprep.mubr.f32.mxu0 0.0
        %464 = vmatmul.mubr.f32.gmra.mxu0 %v332
        %v465 = vpop.f32.mrf.mxu0
        %v466 = vadd.f32 %v304, %v465
        %v467 = vpop.f32.mrf.mxu0
        %468 = vmatprep.mubr.f32.mxu0 0.0
        %469 = vmatmul.mubr.f32.gmra.mxu0 %v335
        %v470 = vpop.f32.mrf.mxu0
        %v471 = vadd.f32 %v304, %v470
        %v472 = vpop.f32.mrf.mxu0
        %473 = vmatprep.mubr.f32.mxu0 0.0
        %474 = vmatmul.mubr.f32.gmra.mxu0 %v338
        %v475 = vpop.f32.mrf.mxu0
        %v476 = vadd.f32 %v304, %v475
        %v477 = vpop.f32.mrf.mxu0
        %478 = vmatprep.mubr.f32.mxu0 0.0
        %479 = vmatmul.mubr.f32.gmra.mxu0 %v341
        %v480 = vpop.f32.mrf.mxu0
        %v481 = vadd.f32 %v304, %v480
        %v482 = vpop.f32.mrf.mxu0
        %483 = vmatprep.mubr.f32.mxu0 0.0
        %484 = vmatmul.mubr.f32.gmra.mxu0 %v344
        %v485 = vpop.f32.mrf.mxu0
        %v486 = vadd.f32 %v304, %v485
        %v487 = vpop.f32.mrf.mxu0
        %488 = vmatprep.mubr.f32.mxu0 0.0
        %489 = vmatmul.mubr.f32.gmra.mxu0 %v347
        %v490 = vpop.f32.mrf.mxu0
        %v491 = vadd.f32 %v304, %v490
        %v492 = vpop.f32.mrf.mxu0
        %493 = vmatprep.mubr.f32.mxu0 0.0
        %494 = vmatmul.mubr.f32.gmra.mxu0 %v350
        %v495 = vpop.f32.mrf.mxu0
        %v496 = vadd.f32 %v304, %v495
        %v497 = vpop.f32.mrf.mxu0
        %498 = vmatprep.mubr.f32.mxu0 0.0
        %499 = vmatmul.mubr.f32.gmra.mxu0 %v353
        %v500 = vpop.f32.mrf.mxu0
        %v501 = vadd.f32 %v304, %v500
        %v502 = vpop.f32.mrf.mxu0
        %503 = vdwg.mxu0
        %v504 = vmax.f32 %v426, 0.0
        %v505 = vmax.f32 %v431, 0.0
        %v506 = vmax.f32 %v436, 0.0
        %v507 = vmax.f32 %v441, 0.0
        %v508 = vmax.f32 %v446, 0.0
        %v509 = vmax.f32 %v451, 0.0
        %v510 = vmax.f32 %v456, 0.0
        %v511 = vmax.f32 %v461, 0.0
        %v512 = vmax.f32 %v466, 0.0
        %v513 = vmax.f32 %v471, 0.0
        %v514 = vmax.f32 %v476, 0.0
        %v515 = vmax.f32 %v481, 0.0
        %v516 = vmax.f32 %v486, 0.0
        %v517 = vmax.f32 %v491, 0.0
        %v518 = vmax.f32 %v496, 0.0
        %v519 = vmax.f32 %v501, 0.0
        %v520 = vld [vmem:[%s3] sm:$0xff]
        %v521 = vld [vmem:[%s3 + $0x8] sm:$0xff]
        %v522 = vld [vmem:[%s3 + $0x10] sm:$0xff]
        %v523 = vld [vmem:[%s3 + $0x18] sm:$0xff]
        %v524 = vld [vmem:[%s3 + $0x20] sm:$0xff]
        %v525 = vld [vmem:[%s3 + $0x28] sm:$0xff]
        %v526 = vld [vmem:[%s3 + $0x30] sm:$0xff]
        %v527 = vld [vmem:[%s3 + $0x38] sm:$0xff]
        %v528 = vld [vmem:[%s3 + $0x40] sm:$0xff]
        %v529 = vld [vmem:[%s3 + $0x48] sm:$0xff]
        %v530 = vld [vmem:[%s3 + $0x50] sm:$0xff]
        %v531 = vld [vmem:[%s3 + $0x58] sm:$0xff]
        %v532 = vld [vmem:[%s3 + $0x60] sm:$0xff]
        %v533 = vld [vmem:[%s3 + $0x68] sm:$0xff]
        %v534 = vld [vmem:[%s3 + $0x70] sm:$0xff]
        %v535 = vld [vmem:[%s3 + $0x78] sm:$0xff]
        %v536 = vld [vmem:[%s4] sm:$0x1]
        %v538 = vlaneseq
        %v539 = vshrl.u32 %v538, 7
        %v540 = vsub.s32 0, %v539
        %v541 = vrot.slane %v536, %v540
        %543 = vmatprep.subr.mxu0 0.0
        %544 = vmatpush1.msra.mxu0 %v535
        %545 = vmatprep.subr.mxu0 0.0
        %546 = vmatpush1.msra.mxu0 %v534
        %547 = vmatprep.subr.mxu0 0.0
        %548 = vmatpush1.msra.mxu0 %v533
        %549 = vmatprep.subr.mxu0 0.0
        %550 = vmatpush1.msra.mxu0 %v532
        %551 = vmatprep.subr.mxu0 0.0
        %552 = vmatpush1.msra.mxu0 %v531
        %553 = vmatprep.subr.mxu0 0.0
        %554 = vmatpush1.msra.mxu0 %v530
        %555 = vmatprep.subr.mxu0 0.0
        %556 = vmatpush1.msra.mxu0 %v529
        %557 = vmatprep.subr.mxu0 0.0
        %558 = vmatpush1.msra.mxu0 %v528
        %559 = vmatprep.subr.mxu0 0.0
        %560 = vmatpush1.msra.mxu0 %v527
        %561 = vmatprep.subr.mxu0 0.0
        %562 = vmatpush1.msra.mxu0 %v526
        %563 = vmatprep.subr.mxu0 0.0
        %564 = vmatpush1.msra.mxu0 %v525
        %565 = vmatprep.subr.mxu0 0.0
        %566 = vmatpush1.msra.mxu0 %v524
        %567 = vmatprep.subr.mxu0 0.0
        %568 = vmatpush1.msra.mxu0 %v523
        %569 = vmatprep.subr.mxu0 0.0
        %570 = vmatpush1.msra.mxu0 %v522
        %571 = vmatprep.subr.mxu0 0.0
        %572 = vmatpush1.msra.mxu0 %v521
        %573 = vmatprep.subr.mxu0 0.0
        %574 = vmatpush1.msra.mxu0 %v520
        %575 = vmatprep.subr.mxu0 0.0
        %576 = vmatpush2.msra.mxu0 0.0
        %577 = vmatprep.subr.mxu0 0.0
        %578 = vmatpush2.msra.mxu0 0.0
        %579 = vmatprep.subr.mxu0 0.0
        %580 = vmatpush2.msra.mxu0 0.0
        %581 = vmatprep.subr.mxu0 0.0
        %582 = vmatpush2.msra.mxu0 0.0
        %583 = vmatprep.subr.mxu0 0.0
        %584 = vmatpush2.msra.mxu0 0.0
        %585 = vmatprep.subr.mxu0 0.0
        %586 = vmatpush2.msra.mxu0 0.0
        %587 = vmatprep.subr.mxu0 0.0
        %588 = vmatpush2.msra.mxu0 0.0
        %589 = vmatprep.subr.mxu0 0.0
        %590 = vmatpush2.msra.mxu0 0.0
        %591 = vmatprep.subr.mxu0 0.0
        %592 = vmatpush2.msra.mxu0 0.0
        %593 = vmatprep.subr.mxu0 0.0
        %594 = vmatpush2.msra.mxu0 0.0
        %595 = vmatprep.subr.mxu0 0.0
        %596 = vmatpush2.msra.mxu0 0.0
        %597 = vmatprep.subr.mxu0 0.0
        %598 = vmatpush2.msra.mxu0 0.0
        %599 = vmatprep.subr.mxu0 0.0
        %600 = vmatpush2.msra.mxu0 0.0
        %601 = vmatprep.subr.mxu0 0.0
        %602 = vmatpush2.msra.mxu0 0.0
        %603 = vmatprep.subr.mxu0 0.0
        %604 = vmatpush2.msra.mxu0 0.0
        %605 = vmatprep.subr.mxu0 0.0
        %606 = vmatpush2.msra.mxu0 0.0
        %607 = vmatprep.mubr.f32.mxu0 0.0
        %608 = vmatmul.mubr.f32.gmra.mxu0 %v504
        %v609 = vpop.f32.mrf.mxu0
        %v610 = vadd.f32 %v541, %v609
        %v611 = vpop.f32.mrf.mxu0
        %612 = vmatprep.mubr.f32.mxu0 0.0
        %613 = vmatmul.mubr.f32.gmra.mxu0 %v505
        %v614 = vpop.f32.mrf.mxu0
        %v615 = vadd.f32 %v541, %v614
        %v616 = vpop.f32.mrf.mxu0
        %617 = vmatprep.mubr.f32.mxu0 0.0
        %618 = vmatmul.mubr.f32.gmra.mxu0 %v506
        %v619 = vpop.f32.mrf.mxu0
        %v620 = vadd.f32 %v541, %v619
        %v621 = vpop.f32.mrf.mxu0
        %622 = vmatprep.mubr.f32.mxu0 0.0
        %623 = vmatmul.mubr.f32.gmra.mxu0 %v507
        %v624 = vpop.f32.mrf.mxu0
        %v625 = vadd.f32 %v541, %v624
        %v626 = vpop.f32.mrf.mxu0
        %627 = vmatprep.mubr.f32.mxu0 0.0
        %628 = vmatmul.mubr.f32.gmra.mxu0 %v508
        %v629 = vpop.f32.mrf.mxu0
        %v630 = vadd.f32 %v541, %v629
        %v631 = vpop.f32.mrf.mxu0
        %632 = vmatprep.mubr.f32.mxu0 0.0
        %633 = vmatmul.mubr.f32.gmra.mxu0 %v509
        %v634 = vpop.f32.mrf.mxu0
        %v635 = vadd.f32 %v541, %v634
        %v636 = vpop.f32.mrf.mxu0
        %637 = vmatprep.mubr.f32.mxu0 0.0
        %638 = vmatmul.mubr.f32.gmra.mxu0 %v510
        %v639 = vpop.f32.mrf.mxu0
        %v640 = vadd.f32 %v541, %v639
        %v641 = vpop.f32.mrf.mxu0
        %642 = vmatprep.mubr.f32.mxu0 0.0
        %643 = vmatmul.mubr.f32.gmra.mxu0 %v511
        %v644 = vpop.f32.mrf.mxu0
        %v645 = vadd.f32 %v541, %v644
        %v646 = vpop.f32.mrf.mxu0
        %647 = vmatprep.mubr.f32.mxu0 0.0
        %648 = vmatmul.mubr.f32.gmra.mxu0 %v512
        %v649 = vpop.f32.mrf.mxu0
        %v650 = vadd.f32 %v541, %v649
        %v651 = vpop.f32.mrf.mxu0
        %652 = vmatprep.mubr.f32.mxu0 0.0
        %653 = vmatmul.mubr.f32.gmra.mxu0 %v513
        %v654 = vpop.f32.mrf.mxu0
        %v655 = vadd.f32 %v541, %v654
        %v656 = vpop.f32.mrf.mxu0
        %657 = vmatprep.mubr.f32.mxu0 0.0
        %658 = vmatmul.mubr.f32.gmra.mxu0 %v514
        %v659 = vpop.f32.mrf.mxu0
        %v660 = vadd.f32 %v541, %v659
        %v661 = vpop.f32.mrf.mxu0
        %662 = vmatprep.mubr.f32.mxu0 0.0
        %663 = vmatmul.mubr.f32.gmra.mxu0 %v515
        %v664 = vpop.f32.mrf.mxu0
        %v665 = vadd.f32 %v541, %v664
        %v666 = vpop.f32.mrf.mxu0
        %667 = vmatprep.mubr.f32.mxu0 0.0
        %668 = vmatmul.mubr.f32.gmra.mxu0 %v516
        %v669 = vpop.f32.mrf.mxu0
        %v670 = vadd.f32 %v541, %v669
        %v671 = vpop.f32.mrf.mxu0
        %672 = vmatprep.mubr.f32.mxu0 0.0
        %673 = vmatmul.mubr.f32.gmra.mxu0 %v517
        %v674 = vpop.f32.mrf.mxu0
        %v675 = vadd.f32 %v541, %v674
        %v676 = vpop.f32.mrf.mxu0
        %677 = vmatprep.mubr.f32.mxu0 0.0
        %678 = vmatmul.mubr.f32.gmra.mxu0 %v518
        %v679 = vpop.f32.mrf.mxu0
        %v680 = vadd.f32 %v541, %v679
        %v681 = vpop.f32.mrf.mxu0
        %682 = vmatprep.mubr.f32.mxu0 0.0
        %683 = vmatmul.mubr.f32.gmra.mxu0 %v519
        %v684 = vpop.f32.mrf.mxu0
        %v685 = vadd.f32 %v541, %v684
        %v686 = vpop.f32.mrf.mxu0
        %687 = vdwg.mxu0
        %v688 = vmax.f32 %v610, 0.0
        %v689 = vmax.f32 %v615, 0.0
        %v690 = vmax.f32 %v620, 0.0
        %v691 = vmax.f32 %v625, 0.0
        %v692 = vmax.f32 %v630, 0.0
        %v693 = vmax.f32 %v635, 0.0
        %v694 = vmax.f32 %v640, 0.0
        %v695 = vmax.f32 %v645, 0.0
        %v696 = vmax.f32 %v650, 0.0
        %v697 = vmax.f32 %v655, 0.0
        %v698 = vmax.f32 %v660, 0.0
        %v699 = vmax.f32 %v665, 0.0
        %v700 = vmax.f32 %v670, 0.0
        %v701 = vmax.f32 %v675, 0.0
        %v702 = vmax.f32 %v680, 0.0
        %v703 = vmax.f32 %v685, 0.0
        %v704 = vld [vmem:[%s5] sm:$0xff]
        %v705 = vld [vmem:[%s5 + $0x8] sm:$0xff]
        %v706 = vld [vmem:[%s5 + $0x10] sm:$0xff]
        %v707 = vld [vmem:[%s5 + $0x18] sm:$0xff]
        %v708 = vld [vmem:[%s5 + $0x20] sm:$0xff]
        %v709 = vld [vmem:[%s5 + $0x28] sm:$0xff]
        %v710 = vld [vmem:[%s5 + $0x30] sm:$0xff]
        %v711 = vld [vmem:[%s5 + $0x38] sm:$0xff]
        %v712 = vld [vmem:[%s5 + $0x40] sm:$0xff]
        %v713 = vld [vmem:[%s5 + $0x48] sm:$0xff]
        %v714 = vld [vmem:[%s5 + $0x50] sm:$0xff]
        %v715 = vld [vmem:[%s5 + $0x58] sm:$0xff]
        %v716 = vld [vmem:[%s5 + $0x60] sm:$0xff]
        %v717 = vld [vmem:[%s5 + $0x68] sm:$0xff]
        %v718 = vld [vmem:[%s5 + $0x70] sm:$0xff]
        %v719 = vld [vmem:[%s5 + $0x78] sm:$0xff]
        %v720 = vld [vmem:[%s6] sm:$0x1]
        %v722 = vlaneseq
        %v723 = vshrl.u32 %v722, 7
        %v724 = vsub.s32 0, %v723
        %v725 = vrot.slane %v720, %v724
        %727 = vmatprep.subr.mxu0 0.0
        %728 = vmatpush1.msra.mxu0 %v719
        %729 = vmatprep.subr.mxu0 0.0
        %730 = vmatpush1.msra.mxu0 %v718
        %731 = vmatprep.subr.mxu0 0.0
        %732 = vmatpush1.msra.mxu0 %v717
        %733 = vmatprep.subr.mxu0 0.0
        %734 = vmatpush1.msra.mxu0 %v716
        %735 = vmatprep.subr.mxu0 0.0
        %736 = vmatpush1.msra.mxu0 %v715
        %737 = vmatprep.subr.mxu0 0.0
        %738 = vmatpush1.msra.mxu0 %v714
        %739 = vmatprep.subr.mxu0 0.0
        %740 = vmatpush1.msra.mxu0 %v713
        %741 = vmatprep.subr.mxu0 0.0
        %742 = vmatpush1.msra.mxu0 %v712
        %743 = vmatprep.subr.mxu0 0.0
        %744 = vmatpush1.msra.mxu0 %v711
        %745 = vmatprep.subr.mxu0 0.0
        %746 = vmatpush1.msra.mxu0 %v710
        %747 = vmatprep.subr.mxu0 0.0
        %748 = vmatpush1.msra.mxu0 %v709
        %749 = vmatprep.subr.mxu0 0.0
        %750 = vmatpush1.msra.mxu0 %v708
        %751 = vmatprep.subr.mxu0 0.0
        %752 = vmatpush1.msra.mxu0 %v707
        %753 = vmatprep.subr.mxu0 0.0
        %754 = vmatpush1.msra.mxu0 %v706
        %755 = vmatprep.subr.mxu0 0.0
        %756 = vmatpush1.msra.mxu0 %v705
        %757 = vmatprep.subr.mxu0 0.0
        %758 = vmatpush1.msra.mxu0 %v704
        %759 = vmatprep.subr.mxu0 0.0
        %760 = vmatpush2.msra.mxu0 0.0
        %761 = vmatprep.subr.mxu0 0.0
        %762 = vmatpush2.msra.mxu0 0.0
        %763 = vmatprep.subr.mxu0 0.0
        %764 = vmatpush2.msra.mxu0 0.0
        %765 = vmatprep.subr.mxu0 0.0
        %766 = vmatpush2.msra.mxu0 0.0
        %767 = vmatprep.subr.mxu0 0.0
        %768 = vmatpush2.msra.mxu0 0.0
        %769 = vmatprep.subr.mxu0 0.0
        %770 = vmatpush2.msra.mxu0 0.0
        %771 = vmatprep.subr.mxu0 0.0
        %772 = vmatpush2.msra.mxu0 0.0
        %773 = vmatprep.subr.mxu0 0.0
        %774 = vmatpush2.msra.mxu0 0.0
        %775 = vmatprep.subr.mxu0 0.0
        %776 = vmatpush2.msra.mxu0 0.0
        %777 = vmatprep.subr.mxu0 0.0
        %778 = vmatpush2.msra.mxu0 0.0
        %779 = vmatprep.subr.mxu0 0.0
        %780 = vmatpush2.msra.mxu0 0.0
        %781 = vmatprep.subr.mxu0 0.0
        %782 = vmatpush2.msra.mxu0 0.0
        %783 = vmatprep.subr.mxu0 0.0
        %784 = vmatpush2.msra.mxu0 0.0
        %785 = vmatprep.subr.mxu0 0.0
        %786 = vmatpush2.msra.mxu0 0.0
        %787 = vmatprep.subr.mxu0 0.0
        %788 = vmatpush2.msra.mxu0 0.0
        %789 = vmatprep.subr.mxu0 0.0
        %790 = vmatpush2.msra.mxu0 0.0
        %791 = vmatprep.mubr.f32.mxu0 0.0
        %792 = vmatmul.mubr.f32.gmra.mxu0 %v688
        %v793 = vpop.f32.mrf.mxu0
        %v794 = vadd.f32 %v725, %v793
        %v795 = vpop.f32.mrf.mxu0
        %796 = vmatprep.mubr.f32.mxu0 0.0
        %797 = vmatmul.mubr.f32.gmra.mxu0 %v689
        %v798 = vpop.f32.mrf.mxu0
        %v799 = vadd.f32 %v725, %v798
        %v800 = vpop.f32.mrf.mxu0
        %801 = vmatprep.mubr.f32.mxu0 0.0
        %802 = vmatmul.mubr.f32.gmra.mxu0 %v690
        %v803 = vpop.f32.mrf.mxu0
        %v804 = vadd.f32 %v725, %v803
        %v805 = vpop.f32.mrf.mxu0
        %806 = vmatprep.mubr.f32.mxu0 0.0
        %807 = vmatmul.mubr.f32.gmra.mxu0 %v691
        %v808 = vpop.f32.mrf.mxu0
        %v809 = vadd.f32 %v725, %v808
        %v810 = vpop.f32.mrf.mxu0
        %811 = vmatprep.mubr.f32.mxu0 0.0
        %812 = vmatmul.mubr.f32.gmra.mxu0 %v692
        %v813 = vpop.f32.mrf.mxu0
        %v814 = vadd.f32 %v725, %v813
        %v815 = vpop.f32.mrf.mxu0
        %816 = vmatprep.mubr.f32.mxu0 0.0
        %817 = vmatmul.mubr.f32.gmra.mxu0 %v693
        %v818 = vpop.f32.mrf.mxu0
        %v819 = vadd.f32 %v725, %v818
        %v820 = vpop.f32.mrf.mxu0
        %821 = vmatprep.mubr.f32.mxu0 0.0
        %822 = vmatmul.mubr.f32.gmra.mxu0 %v694
        %v823 = vpop.f32.mrf.mxu0
        %v824 = vadd.f32 %v725, %v823
        %v825 = vpop.f32.mrf.mxu0
        %826 = vmatprep.mubr.f32.mxu0 0.0
        %827 = vmatmul.mubr.f32.gmra.mxu0 %v695
        %v828 = vpop.f32.mrf.mxu0
        %v829 = vadd.f32 %v725, %v828
        %v830 = vpop.f32.mrf.mxu0
        %831 = vmatprep.mubr.f32.mxu0 0.0
        %832 = vmatmul.mubr.f32.gmra.mxu0 %v696
        %v833 = vpop.f32.mrf.mxu0
        %v834 = vadd.f32 %v725, %v833
        %v835 = vpop.f32.mrf.mxu0
        %836 = vmatprep.mubr.f32.mxu0 0.0
        %837 = vmatmul.mubr.f32.gmra.mxu0 %v697
        %v838 = vpop.f32.mrf.mxu0
        %v839 = vadd.f32 %v725, %v838
        %v840 = vpop.f32.mrf.mxu0
        %841 = vmatprep.mubr.f32.mxu0 0.0
        %842 = vmatmul.mubr.f32.gmra.mxu0 %v698
        %v843 = vpop.f32.mrf.mxu0
        %v844 = vadd.f32 %v725, %v843
        %v845 = vpop.f32.mrf.mxu0
        %846 = vmatprep.mubr.f32.mxu0 0.0
        %847 = vmatmul.mubr.f32.gmra.mxu0 %v699
        %v848 = vpop.f32.mrf.mxu0
        %v849 = vadd.f32 %v725, %v848
        %v850 = vpop.f32.mrf.mxu0
        %851 = vmatprep.mubr.f32.mxu0 0.0
        %852 = vmatmul.mubr.f32.gmra.mxu0 %v700
        %v853 = vpop.f32.mrf.mxu0
        %v854 = vadd.f32 %v725, %v853
        %v855 = vpop.f32.mrf.mxu0
        %856 = vmatprep.mubr.f32.mxu0 0.0
        %857 = vmatmul.mubr.f32.gmra.mxu0 %v701
        %v858 = vpop.f32.mrf.mxu0
        %v859 = vadd.f32 %v725, %v858
        %v860 = vpop.f32.mrf.mxu0
        %861 = vmatprep.mubr.f32.mxu0 0.0
        %862 = vmatmul.mubr.f32.gmra.mxu0 %v702
        %v863 = vpop.f32.mrf.mxu0
        %v864 = vadd.f32 %v725, %v863
        %v865 = vpop.f32.mrf.mxu0
        %866 = vmatprep.mubr.f32.mxu0 0.0
        %867 = vmatmul.mubr.f32.gmra.mxu0 %v703
        %v868 = vpop.f32.mrf.mxu0
        %v869 = vadd.f32 %v725, %v868
        %v870 = vpop.f32.mrf.mxu0
        %871 = vdwg.mxu0
        %872 = vst [vmem:[%s272] sm:$0xff] %v794
        %873 = vst [vmem:[%s272 + $0x8] sm:$0xff] %v799
        %874 = vst [vmem:[%s272 + $0x10] sm:$0xff] %v804
        %875 = vst [vmem:[%s272 + $0x18] sm:$0xff] %v809
        %876 = vst [vmem:[%s272 + $0x20] sm:$0xff] %v814
        %877 = vst [vmem:[%s272 + $0x28] sm:$0xff] %v819
        %878 = vst [vmem:[%s272 + $0x30] sm:$0xff] %v824
        %879 = vst [vmem:[%s272 + $0x38] sm:$0xff] %v829
        %880 = vst [vmem:[%s272 + $0x40] sm:$0xff] %v834
        %881 = vst [vmem:[%s272 + $0x48] sm:$0xff] %v839
        %882 = vst [vmem:[%s272 + $0x50] sm:$0xff] %v844
        %883 = vst [vmem:[%s272 + $0x58] sm:$0xff] %v849
        %884 = vst [vmem:[%s272 + $0x60] sm:$0xff] %v854
        %885 = vst [vmem:[%s272 + $0x68] sm:$0xff] %v859
        %886 = vst [vmem:[%s272 + $0x70] sm:$0xff] %v864
        %887 = vst [vmem:[%s272 + $0x78] sm:$0xff] %v869
        %s888 = sand.u32 %s181, 1
        %s889 = scalar_lea.sflag [#allocation3], %s888
        %s890 = sand.u32 %s181, 1
        %s891 = smul.addr %s890, 128
        %s892 = scalar_lea.vmem [#allocation2], %s891
        // Predicated region
        $region49: #{tpu_custom_call.1} parent=47 // pred_check
          %p893 = pneg %p191
        $region50: #{tpu_custom_call.1} parent=47 // pred_check_branch
          %895 = sbr.rel (%p893) target = $region52
        $region51: #{tpu_custom_call.1} parent=47 // pred_region
          %s896 = smul.u32 16, %s21
          %s898 = ssub.s32 2048, 2048
          %899 = vsyncadd %s889, %s898
          %s900 = smul.addr %s896, 128
          %s901 = scalar_lea.hbm %s7, %s900
          %s902 = sshll.u32 %s892, 4
          %s903 = int_to_ptr.vmem [resolvable:$true] %s902
          %908 = dma.vmem_to_hbm [thread:$0]  %s903, 2048, %s901, %s889, 128, 128, 8
        $region52: #{tpu_custom_call.1} parent=47 // pred_fallthru
          _
      $region48: #{tpu_custom_call.1} parent=5 // pred_fallthru
        _
      %p909 = scmp.le.s32.totalorder 2, %s16
      // Predicated region
      $region53: #{tpu_custom_call.1} parent=5 // pred_check
        %p910 = pneg %p909
      $region54: #{tpu_custom_call.1} parent=5 // pred_check_branch
        %912 = sbr.rel (%p910) target = $region56
      $region55: #{tpu_custom_call.1} parent=5 // pred_region
        %s913 = ssub.s32 %s16, 2
        // Predicated region
        $region57: #{tpu_custom_call.1} parent=55 // pred_check
          %p914 = pneg %p197
        $region58: #{tpu_custom_call.1} parent=55 // pred_check_branch
          %916 = sbr.rel (%p914) target = $region60
        $region59: #{tpu_custom_call.1} parent=55 // pred_region
          %s917 = sand.u32 %s182, 1
          %s918 = scalar_lea.sflag [#allocation3], %s917
          %s919 = sand.u32 %s182, 1
          %s920 = smul.addr %s919, 128
          %s921 = scalar_lea.vmem [#allocation2], %s920
          %922 = dma.done %s918, 2048
        $region60: #{tpu_custom_call.1} parent=55 // pred_fallthru
          _
      $region56: #{tpu_custom_call.1} parent=5 // pred_fallthru
        _
    $region6: #{tpu_custom_call.1} parent=1 // loop_footer
      %s20 = sadd.s32 1, %s16
    $region7: #{tpu_custom_call.1} parent=1 // loop_footer_branch
      %15 = sbr.rel target = $region3
    $region8: #{tpu_custom_call.1} parent=1 // loop_exit
      _
    %923 = vsyncpa [#allocation3], 1
    %s924 = scalar_lea.sflag [#allocation3], 1
    %925 = vsyncpa %s924, 1

// kernel: tpu_custom_call.1
$region0: #{tpu_custom_call.1}
  #allocation0 [shape = 'u32[]', space=smem, size = 0x4, offset = 0x4, fixed_abs, tag = 'smem constant byte address 0x4 - core index']
  #allocation1 [shape = 'u32[144,128]{1,0:T(1,128)}', space=vmem, size = 0x12000, scoped, tag = 'internal scratch']
  %s0 = inlined_call_operand.vmem [shape: f32[256,20], index: 0, kind: input, shape index: {}]
  %s1 = inlined_call_operand.vmem [shape: f32[20,128], index: 1, kind: input, shape index: {}]
  %s2 = inlined_call_operand.vmem [shape: f32[1,128], index: 2, kind: input, shape index: {}]
  %s3 = inlined_call_operand.vmem [shape: f32[128,128], index: 3, kind: input, shape index: {}]
  %s4 = inlined_call_operand.vmem [shape: f32[1,128], index: 4, kind: input, shape index: {}]
  %s5 = inlined_call_operand.vmem [shape: f32[128,128], index: 5, kind: input, shape index: {}]
  %s6 = inlined_call_operand.vmem [shape: f32[1,128], index: 6, kind: input, shape index: {}]
  %s7 = inlined_call_operand.hbm [shape: f32[256,128], index: 7, kind: output, shape index: {}]
  %s8 = sld [smem:[#allocation0]]
  $region61: #{tpu_custom_call.1} parent=0
    _
  %s10 = ssub.s32 1, %s8
  %s11 = scalar_select 0, %s10, %s8
  $region1: #{tpu_custom_call.1} parent=0
    #allocation2 [shape = 'u8[131072]{0}', space=vmem, size = 0x20000, scoped, tag = 'output window, operand 0']
    #allocation3 [shape = 's32[2]{0}', space=sflag, size = 0x8, scoped, tag = 'scoped memory for tpu_custom_call.1']
    %12 = vsyncpa [#allocation3], 0
    %s13 = scalar_lea.sflag [#allocation3], 1
    %14 = vsyncpa %s13, 0
    loop: start=0, step=1, limit=4
    $region2: #{tpu_custom_call.1} parent=1 // loop_pre_header
      _
    $region3: #{tpu_custom_call.1} parent=1 // loop_header
      %s16 = sphi 0, %s20
      %p17 = scmp.ge.s32.totalorder %s16, 4
      %s26 = sphi 0, %s28
      %s29 = sphi 0, %s26
      %s30 = sphi 0, %s29
      %s46 = sphi 0, %s30
      %s50 = sphi 0, %s50
      %s52 = sphi 0, %s50
      %s53 = sphi 0, %s52
      %s67 = sphi 0, %s53
      %s71 = sphi 0, %s71
      %s73 = sphi 0, %s71
      %s74 = sphi 0, %s73
      %s88 = sphi 0, %s74
      %s92 = sphi 0, %s92
      %s94 = sphi 0, %s92
      %s95 = sphi 0, %s94
      %s109 = sphi 0, %s95
      %s113 = sphi 0, %s113
      %s115 = sphi 0, %s113
      %s116 = sphi 0, %s115
      %s130 = sphi 0, %s116
      %s134 = sphi 0, %s134
      %s136 = sphi 0, %s134
      %s137 = sphi 0, %s136
      %s151 = sphi 0, %s137
      %s155 = sphi 0, %s155
      %s157 = sphi 0, %s155
      %s158 = sphi 0, %s157
      %s172 = sphi 0, %s158
      %s178 = sphi 0, %s180
      %s181 = sphi 0, %s178
      %s182 = sphi 0, %s181
      %s198 = sphi 0, %s182
    $region4: #{tpu_custom_call.1} parent=1 // loop_header_branch
      %19 = sbr.rel (%p17) target = $region8
    $region5: #{tpu_custom_call.1} parent=1 // loop_body
      %s21 = ssub.s32 %s16, 1
      %s22 = ssub.s32 %s16, 2
      %s23 = sadd.s32 %s16, 1
      %s24 = ssub.s32 %s16, %s23
      %p25 = scmp.eq.s32.totalorder %s24, 0
      %s27 = sadd.s32 %s26, 1
      %s28 = scalar_select %p25, %s26, %s27
      %p31 = pneg %p25
      %p32 = scmp.eq.s32.totalorder %s16, 1
      %p33 = por %p31, %p32
      %p34 = scmp.ne.s32.totalorder %s26, %s29
      %p35 = scmp.eq.s32.totalorder %s16, 0
      %p36 = por %p34, %p35
      %p37 = scmp.ne.s32.totalorder %s26, %s29
      %p38 = scmp.eq.s32.totalorder %s21, 1
      %p39 = por %p37, %p38
      %p40 = scmp.ne.s32.totalorder %s29, %s30
      %p41 = scmp.eq.s32.totalorder %s21, 0
      %p42 = por %p40, %p41
      %p43 = scmp.ne.s32.totalorder %s29, %s30
      %p44 = scmp.eq.s32.totalorder %s22, 1
      %p45 = por %p43, %p44
      %p47 = scmp.ne.s32.totalorder %s30, %s46
      %p48 = scmp.eq.s32.totalorder %s22, 0
      %p49 = por %p47, %p48
      %s51 = sadd.s32 %s50, 1
      %p54 = scmp.eq.s32.totalorder %s16, 1
      %p55 = scmp.ne.s32.totalorder %s50, %s52
      %p56 = scmp.eq.s32.totalorder %s16, 0
      %p57 = por %p55, %p56
      %p58 = scmp.ne.s32.totalorder %s50, %s52
      %p59 = scmp.eq.s32.totalorder %s21, 1
      %p60 = por %p58, %p59
      %p61 = scmp.ne.s32.totalorder %s52, %s53
      %p62 = scmp.eq.s32.totalorder %s21, 0
      %p63 = por %p61, %p62
      %p64 = scmp.ne.s32.totalorder %s52, %s53
      %p65 = scmp.eq.s32.totalorder %s22, 1
      %p66 = por %p64, %p65
      %p68 = scmp.ne.s32.totalorder %s53, %s67
      %p69 = scmp.eq.s32.totalorder %s22, 0
      %p70 = por %p68, %p69
      %s72 = sadd.s32 %s71, 1
      %p75 = scmp.eq.s32.totalorder %s16, 1
      %p76 = scmp.ne.s32.totalorder %s71, %s73
      %p77 = scmp.eq.s32.totalorder %s16, 0
      %p78 = por %p76, %p77
      %p79 = scmp.ne.s32.totalorder %s71, %s73
      %p80 = scmp.eq.s32.totalorder %s21, 1
      %p81 = por %p79, %p80
      %p82 = scmp.ne.s32.totalorder %s73, %s74
      %p83 = scmp.eq.s32.totalorder %s21, 0
      %p84 = por %p82, %p83
      %p85 = scmp.ne.s32.totalorder %s73, %s74
      %p86 = scmp.eq.s32.totalorder %s22, 1
      %p87 = por %p85, %p86
      %p89 = scmp.ne.s32.totalorder %s74, %s88
      %p90 = scmp.eq.s32.totalorder %s22, 0
      %p91 = por %p89, %p90
      %s93 = sadd.s32 %s92, 1
      %p96 = scmp.eq.s32.totalorder %s16, 1
      %p97 = scmp.ne.s32.totalorder %s92, %s94
      %p98 = scmp.eq.s32.totalorder %s16, 0
      %p99 = por %p97, %p98
      %p100 = scmp.ne.s32.totalorder %s92, %s94
      %p101 = scmp.eq.s32.totalorder %s21, 1
      %p102 = por %p100, %p101
      %p103 = scmp.ne.s32.totalorder %s94, %s95
      %p104 = scmp.eq.s32.totalorder %s21, 0
      %p105 = por %p103, %p104
      %p106 = scmp.ne.s32.totalorder %s94, %s95
      %p107 = scmp.eq.s32.totalorder %s22, 1
      %p108 = por %p106, %p107
      %p110 = scmp.ne.s32.totalorder %s95, %s109
      %p111 = scmp.eq.s32.totalorder %s22, 0
      %p112 = por %p110, %p111
      %s114 = sadd.s32 %s113, 1
      %p117 = scmp.eq.s32.totalorder %s16, 1
      %p118 = scmp.ne.s32.totalorder %s113, %s115
      %p119 = scmp.eq.s32.totalorder %s16, 0
      %p120 = por %p118, %p119
      %p121 = scmp.ne.s32.totalorder %s113, %s115
      %p122 = scmp.eq.s32.totalorder %s21, 1
      %p123 = por %p121, %p122
      %p124 = scmp.ne.s32.totalorder %s115, %s116
      %p125 = scmp.eq.s32.totalorder %s21, 0
      %p126 = por %p124, %p125
      %p127 = scmp.ne.s32.totalorder %s115, %s116
      %p128 = scmp.eq.s32.totalorder %s22, 1
      %p129 = por %p127, %p128
      %p131 = scmp.ne.s32.totalorder %s116, %s130
      %p132 = scmp.eq.s32.totalorder %s22, 0
      %p133 = por %p131, %p132
      %s135 = sadd.s32 %s134, 1
      %p138 = scmp.eq.s32.totalorder %s16, 1
      %p139 = scmp.ne.s32.totalorder %s134, %s136
      %p140 = scmp.eq.s32.totalorder %s16, 0
      %p141 = por %p139, %p140
      %p142 = scmp.ne.s32.totalorder %s134, %s136
      %p143 = scmp.eq.s32.totalorder %s21, 1
      %p144 = por %p142, %p143
      %p145 = scmp.ne.s32.totalorder %s136, %s137
      %p146 = scmp.eq.s32.totalorder %s21, 0
      %p147 = por %p145, %p146
      %p148 = scmp.ne.s32.totalorder %s136, %s137
      %p149 = scmp.eq.s32.totalorder %s22, 1
      %p150 = por %p148, %p149
      %p152 = scmp.ne.s32.totalorder %s137, %s151
      %p153 = scmp.eq.s32.totalorder %s22, 0
      %p154 = por %p152, %p153
      %s156 = sadd.s32 %s155, 1
      %p159 = scmp.eq.s32.totalorder %s16, 1
      %p160 = scmp.ne.s32.totalorder %s155, %s157
      %p161 = scmp.eq.s32.totalorder %s16, 0
      %p162 = por %p160, %p161
      %p163 = scmp.ne.s32.totalorder %s155, %s157
      %p164 = scmp.eq.s32.totalorder %s21, 1
      %p165 = por %p163, %p164
      %p166 = scmp.ne.s32.totalorder %s157, %s158
      %p167 = scmp.eq.s32.totalorder %s21, 0
      %p168 = por %p166, %p167
      %p169 = scmp.ne.s32.totalorder %s157, %s158
      %p170 = scmp.eq.s32.totalorder %s22, 1
      %p171 = por %p169, %p170
      %p173 = scmp.ne.s32.totalorder %s158, %s172
      %p174 = scmp.eq.s32.totalorder %s22, 0
      %p175 = por %p173, %p174
      %s176 = ssub.s32 %s16, %s23
      %p177 = scmp.eq.s32.totalorder %s176, 0
      %s179 = sadd.s32 %s178, 1
      %s180 = scalar_select %p177, %s178, %s179
      %p183 = pneg %p177
      %p184 = scmp.eq.s32.totalorder %s16, 1
      %p185 = por %p183, %p184
      %p186 = scmp.ne.s32.totalorder %s178, %s181
      %p187 = scmp.eq.s32.totalorder %s16, 0
      %p188 = por %p186, %p187
      %p189 = scmp.ne.s32.totalorder %s178, %s181
      %p190 = scmp.eq.s32.totalorder %s21, 1
      %p191 = por %p189, %p190
      %p192 = scmp.ne.s32.totalorder %s181, %s182
      %p193 = scmp.eq.s32.totalorder %s21, 0
      %p194 = por %p192, %p193
      %p195 = scmp.ne.s32.totalorder %s181, %s182
      %p196 = scmp.eq.s32.totalorder %s22, 1
      %p197 = por %p195, %p196
      %p199 = scmp.ne.s32.totalorder %s182, %s198
      %p200 = scmp.eq.s32.totalorder %s22, 0
      %p201 = por %p199, %p200
      %p202 = scmp.le.s32.totalorder 1, %s16
      %p203 = scmp.lt.s32.totalorder %s16, 3
      %p204 = pnand %p202, %p203
      %p205 = pneg %p204
      // Predicated region
      $region9: #{tpu_custom_call.1} parent=5 // pred_check
        _
      $region10: #{tpu_custom_call.1} parent=5 // pred_check_branch
        %207 = sbr.rel (%p204) target = $region12
      $region11: #{tpu_custom_call.1} parent=5 // pred_region
        %s208 = ssub.s32 %s16, 1
        // Predicated region
        $region13: #{tpu_custom_call.1} parent=11 // pred_check
          %p209 = pneg %p63
        $region14: #{tpu_custom_call.1} parent=11 // pred_check_branch
          %211 = sbr.rel (%p209) target = $region16
        $region15: #{tpu_custom_call.1} parent=11 // pred_region
          _
        $region16: #{tpu_custom_call.1} parent=11 // pred_fallthru
          _
        // Predicated region
        $region17: #{tpu_custom_call.1} parent=11 // pred_check
          %p212 = pneg %p84
        $region18: #{tpu_custom_call.1} parent=11 // pred_check_branch
          %214 = sbr.rel (%p212) target = $region20
        $region19: #{tpu_custom_call.1} parent=11 // pred_region
          _
        $region20: #{tpu_custom_call.1} parent=11 // pred_fallthru
          _
        // Predicated region
        $region21: #{tpu_custom_call.1} parent=11 // pred_check
          %p215 = pneg %p105
        $region22: #{tpu_custom_call.1} parent=11 // pred_check_branch
          %217 = sbr.rel (%p215) target = $region24
        $region23: #{tpu_custom_call.1} parent=11 // pred_region
          _
        $region24: #{tpu_custom_call.1} parent=11 // pred_fallthru
          _
        // Predicated region
        $region25: #{tpu_custom_call.1} parent=11 // pred_check
          %p218 = pneg %p126
        $region26: #{tpu_custom_call.1} parent=11 // pred_check_branch
          %220 = sbr.rel (%p218) target = $region28
        $region27: #{tpu_custom_call.1} parent=11 // pred_region
          _
        $region28: #{tpu_custom_call.1} parent=11 // pred_fallthru
          _
        // Predicated region
        $region29: #{tpu_custom_call.1} parent=11 // pred_check
          %p221 = pneg %p147
        $region30: #{tpu_custom_call.1} parent=11 // pred_check_branch
          %223 = sbr.rel (%p221) target = $region32
        $region31: #{tpu_custom_call.1} parent=11 // pred_region
          _
        $region32: #{tpu_custom_call.1} parent=11 // pred_fallthru
          _
        // Predicated region
        $region33: #{tpu_custom_call.1} parent=11 // pred_check
          %p224 = pneg %p168
        $region34: #{tpu_custom_call.1} parent=11 // pred_check_branch
          %226 = sbr.rel (%p224) target = $region36
        $region35: #{tpu_custom_call.1} parent=11 // pred_region
          _
        $region36: #{tpu_custom_call.1} parent=11 // pred_fallthru
          _
      $region12: #{tpu_custom_call.1} parent=5 // pred_fallthru
        _
      %p227 = scmp.lt.s32.totalorder %s16, 2
      // Predicated region
      $region37: #{tpu_custom_call.1} parent=5 // pred_check
        %p228 = pneg %p227
      $region38: #{tpu_custom_call.1} parent=5 // pred_check_branch
        %230 = sbr.rel (%p228) target = $region40
      $region39: #{tpu_custom_call.1} parent=5 // pred_region
        // Predicated region
        $region41: #{tpu_custom_call.1} parent=39 // pred_check
          %p231 = pneg %p36
        $region42: #{tpu_custom_call.1} parent=39 // pred_check_branch
          %233 = sbr.rel (%p231) target = $region44
        $region43: #{tpu_custom_call.1} parent=39 // pred_region
          %s234 = smul.u32 16, %s16
          %p235 = scmp.lt.s32.totalorder %s234, 31
          %s236 = scalar_select %p235, %s234, 31
          %s237 = smul.addr %s236, 8
          %s238 = scalar_lea.vmem %s0, %s237
          %s239 = smul.u32 16, %s16
        $region44: #{tpu_custom_call.1} parent=39 // pred_fallthru
          _
      $region40: #{tpu_custom_call.1} parent=5 // pred_fallthru
        _
      %p240 = scmp.le.s32.totalorder 1, %s16
      %p241 = scmp.lt.s32.totalorder %s16, 3
      %p242 = pnand %p240, %p241
      %p243 = pneg %p242
      // Predicated region
      $region45: #{tpu_custom_call.1} parent=5 // pred_check
        _
      $region46: #{tpu_custom_call.1} parent=5 // pred_check_branch
        %245 = sbr.rel (%p242) target = $region48
      $region47: #{tpu_custom_call.1} parent=5 // pred_region
        %s246 = ssub.s32 %s16, 1
        %s247 = smul.u32 16, %s21
        %p248 = scmp.lt.s32.totalorder %s247, 31
        %s249 = scalar_select %p248, %s247, 31
        %s250 = smul.addr %s249, 8
        %s251 = scalar_lea.vmem %s0, %s250
        %p252 = pneg %p42
        %p253 = pneg %p39
        %p254 = pneg %p63
        %p255 = pneg %p60
        %p256 = pneg %p84
        %p257 = pneg %p81
        %p258 = pneg %p105
        %p259 = pneg %p102
        %p260 = pneg %p126
        %p261 = pneg %p123
        %p262 = pneg %p147
        %p263 = pneg %p144
        %p264 = pneg %p168
        %p265 = pneg %p165
        %p266 = pneg %p194
        %p267 = pneg %p191
        %s268 = sand.u32 %s181, 1
        %s269 = scalar_lea.sflag [#allocation3], %s268
        %s270 = sand.u32 %s181, 1
        %s271 = smul.addr %s270, 128
        %s272 = scalar_lea.vmem [#allocation2], %s271
        %s273 = smul.u32 16, %s21
        %p274 = scmp.lt.s32.totalorder %s273, 31
        %s275 = scalar_select %p274, %s273, 31
        %s276 = smul.addr %s275, 8
        %s277 = scalar_lea.vmem %s0, %s276
        %s278 = smul.u32 16, %s21
        %s279 = smul.u32 16, %s21
        %v280 = vld [vmem:[%s277] sm:$0xff]
        %v281 = vld [vmem:[%s277 + $0x8] sm:$0xff]
        %v282 = vld [vmem:[%s277 + $0x10] sm:$0xff]
        %v283 = vld [vmem:[%s277 + $0x18] sm:$0xff]
        %v284 = vld [vmem:[%s277 + $0x20] sm:$0xff]
        %v285 = vld [vmem:[%s277 + $0x28] sm:$0xff]
        %v286 = vld [vmem:[%s277 + $0x30] sm:$0xff]
        %v287 = vld [vmem:[%s277 + $0x38] sm:$0xff]
        %v288 = vld [vmem:[%s277 + $0x40] sm:$0xff]
        %v289 = vld [vmem:[%s277 + $0x48] sm:$0xff]
        %v290 = vld [vmem:[%s277 + $0x50] sm:$0xff]
        %v291 = vld [vmem:[%s277 + $0x58] sm:$0xff]
        %v292 = vld [vmem:[%s277 + $0x60] sm:$0xff]
        %v293 = vld [vmem:[%s277 + $0x68] sm:$0xff]
        %v294 = vld [vmem:[%s277 + $0x70] sm:$0xff]
        %v295 = vld [vmem:[%s277 + $0x78] sm:$0xff]
        %v296 = vld [vmem:[%s1] sm:$0xff]
        %v297 = vld [vmem:[%s1 + $0x8] sm:$0xff]
        %v298 = vld [vmem:[%s1 + $0x10] sm:$0xf]
        %v299 = vld [vmem:[%s2] sm:$0x1]
        %v301 = vlaneseq
        %v302 = vshrl.u32 %v301, 7
        %v303 = vsub.s32 0, %v302
        %v304 = vrot.slane %v299, %v303
        %vm306 = vcmask 162816
        %v308 = vsel %vm306, %v280, 0
        %v311 = vsel %vm306, %v281, 0
        %v314 = vsel %vm306, %v282, 0
        %v317 = vsel %vm306, %v283, 0
        %v320 = vsel %vm306, %v284, 0
        %v323 = vsel %vm306, %v285, 0
        %v326 = vsel %vm306, %v286, 0
        %v329 = vsel %vm306, %v287, 0
        %v332 = vsel %vm306, %v288, 0
        %v335 = vsel %vm306, %v289, 0
        %v338 = vsel %vm306, %v290, 0
        %v341 = vsel %vm306, %v291, 0
        %v344 = vsel %vm306, %v292, 0
        %v347 = vsel %vm306, %v293, 0
        %v350 = vsel %vm306, %v294, 0
        %v353 = vsel %vm306, %v295, 0
        %vm355 = vcmask 1043456
        %v357 = vsel %vm355, %v298, 0
        %359 = vmatprep.subr.mxu0 0.0
        %360 = vmatpush1.msra.mxu0 0.0
        %361 = vmatprep.subr.mxu0 0.0
        %362 = vmatpush1.msra.mxu0 0.0
        %363 = vmatprep.subr.mxu0 0.0
        %364 = vmatpush1.msra.mxu0 0.0
        %365 = vmatprep.subr.mxu0 0.0
        %366 = vmatpush1.msra.mxu0 0.0
        %367 = vmatprep.subr.mxu0 0.0
        %368 = vmatpush1.msra.mxu0 0.0
        %369 = vmatprep.subr.mxu0 0.0
        %370 = vmatpush1.msra.mxu0 0.0
        %371 = vmatprep.subr.mxu0 0.0
        %372 = vmatpush1.msra.mxu0 0.0
        %373 = vmatprep.subr.mxu0 0.0
        %374 = vmatpush1.msra.mxu0 0.0
        %375 = vmatprep.subr.mxu0 0.0
        %376 = vmatpush1.msra.mxu0 0.0
        %377 = vmatprep.subr.mxu0 0.0
        %378 = vmatpush1.msra.mxu0 0.0
        %379 = vmatprep.subr.mxu0 0.0
        %380 = vmatpush1.msra.mxu0 0.0
        %381 = vmatprep.subr.mxu0 0.0
        %382 = vmatpush1.msra.mxu0 0.0
        %383 = vmatprep.subr.mxu0 0.0
        %384 = vmatpush1.msra.mxu0 0.0
        %385 = vmatprep.subr.mxu0 0.0
        %386 = vmatpush1.msra.mxu0 %v357
        %387 = vmatprep.subr.mxu0 0.0
        %388 = vmatpush1.msra.mxu0 %v297
        %389 = vmatprep.subr.mxu0 0.0
        %390 = vmatpush1.msra.mxu0 %v296
        %391 = vmatprep.subr.mxu0 0.0
        %392 = vmatpush2.msra.mxu0 0.0
        %393 = vmatprep.subr.mxu0 0.0
        %394 = vmatpush2.msra.mxu0 0.0
        %395 = vmatprep.subr.mxu0 0.0
        %396 = vmatpush2.msra.mxu0 0.0
        %397 = vmatprep.subr.mxu0 0.0
        %398 = vmatpush2.msra.mxu0 0.0
        %399 = vmatprep.subr.mxu0 0.0
        %400 = vmatpush2.msra.mxu0 0.0
        %401 = vmatprep.subr.mxu0 0.0
        %402 = vmatpush2.msra.mxu0 0.0
        %403 = vmatprep.subr.mxu0 0.0
        %404 = vmatpush2.msra.mxu0 0.0
        %405 = vmatprep.subr.mxu0 0.0
        %406 = vmatpush2.msra.mxu0 0.0
        %407 = vmatprep.subr.mxu0 0.0
        %408 = vmatpush2.msra.mxu0 0.0
        %409 = vmatprep.subr.mxu0 0.0
        %410 = vmatpush2.msra.mxu0 0.0
        %411 = vmatprep.subr.mxu0 0.0
        %412 = vmatpush2.msra.mxu0 0.0
        %413 = vmatprep.subr.mxu0 0.0
        %414 = vmatpush2.msra.mxu0 0.0
        %415 = vmatprep.subr.mxu0 0.0
        %416 = vmatpush2.msra.mxu0 0.0
        %417 = vmatprep.subr.mxu0 0.0
        %418 = vmatpush2.msra.mxu0 0.0
        %419 = vmatprep.subr.mxu0 0.0
        %420 = vmatpush2.msra.mxu0 0.0
        %421 = vmatprep.subr.mxu0 0.0
        %422 = vmatpush2.msra.mxu0 0.0
        %423 = vmatprep.mubr.f32.mxu0 0.0
        %424 = vmatmul.mubr.f32.gmra.mxu0 %v308
        %v425 = vpop.f32.mrf.mxu0
        %v426 = vadd.f32 %v304, %v425
        %v427 = vpop.f32.mrf.mxu0
        %428 = vmatprep.mubr.f32.mxu0 0.0
        %429 = vmatmul.mubr.f32.gmra.mxu0 %v311
        %v430 = vpop.f32.mrf.mxu0
        %v431 = vadd.f32 %v304, %v430
        %v432 = vpop.f32.mrf.mxu0
        %433 = vmatprep.mubr.f32.mxu0 0.0
        %434 = vmatmul.mubr.f32.gmra.mxu0 %v314
        %v435 = vpop.f32.mrf.mxu0
        %v436 = vadd.f32 %v304, %v435
        %v437 = vpop.f32.mrf.mxu0
        %438 = vmatprep.mubr.f32.mxu0 0.0
        %439 = vmatmul.mubr.f32.gmra.mxu0 %v317
        %v440 = vpop.f32.mrf.mxu0
        %v441 = vadd.f32 %v304, %v440
        %v442 = vpop.f32.mrf.mxu0
        %443 = vmatprep.mubr.f32.mxu0 0.0
        %444 = vmatmul.mubr.f32.gmra.mxu0 %v320
        %v445 = vpop.f32.mrf.mxu0
        %v446 = vadd.f32 %v304, %v445
        %v447 = vpop.f32.mrf.mxu0
        %448 = vmatprep.mubr.f32.mxu0 0.0
        %449 = vmatmul.mubr.f32.gmra.mxu0 %v323
        %v450 = vpop.f32.mrf.mxu0
        %v451 = vadd.f32 %v304, %v450
        %v452 = vpop.f32.mrf.mxu0
        %453 = vmatprep.mubr.f32.mxu0 0.0
        %454 = vmatmul.mubr.f32.gmra.mxu0 %v326
        %v455 = vpop.f32.mrf.mxu0
        %v456 = vadd.f32 %v304, %v455
        %v457 = vpop.f32.mrf.mxu0
        %458 = vmatprep.mubr.f32.mxu0 0.0
        %459 = vmatmul.mubr.f32.gmra.mxu0 %v329
        %v460 = vpop.f32.mrf.mxu0
        %v461 = vadd.f32 %v304, %v460
        %v462 = vpop.f32.mrf.mxu0
        %463 = vmatprep.mubr.f32.mxu0 0.0
        %464 = vmatmul.mubr.f32.gmra.mxu0 %v332
        %v465 = vpop.f32.mrf.mxu0
        %v466 = vadd.f32 %v304, %v465
        %v467 = vpop.f32.mrf.mxu0
        %468 = vmatprep.mubr.f32.mxu0 0.0
        %469 = vmatmul.mubr.f32.gmra.mxu0 %v335
        %v470 = vpop.f32.mrf.mxu0
        %v471 = vadd.f32 %v304, %v470
        %v472 = vpop.f32.mrf.mxu0
        %473 = vmatprep.mubr.f32.mxu0 0.0
        %474 = vmatmul.mubr.f32.gmra.mxu0 %v338
        %v475 = vpop.f32.mrf.mxu0
        %v476 = vadd.f32 %v304, %v475
        %v477 = vpop.f32.mrf.mxu0
        %478 = vmatprep.mubr.f32.mxu0 0.0
        %479 = vmatmul.mubr.f32.gmra.mxu0 %v341
        %v480 = vpop.f32.mrf.mxu0
        %v481 = vadd.f32 %v304, %v480
        %v482 = vpop.f32.mrf.mxu0
        %483 = vmatprep.mubr.f32.mxu0 0.0
        %484 = vmatmul.mubr.f32.gmra.mxu0 %v344
        %v485 = vpop.f32.mrf.mxu0
        %v486 = vadd.f32 %v304, %v485
        %v487 = vpop.f32.mrf.mxu0
        %488 = vmatprep.mubr.f32.mxu0 0.0
        %489 = vmatmul.mubr.f32.gmra.mxu0 %v347
        %v490 = vpop.f32.mrf.mxu0
        %v491 = vadd.f32 %v304, %v490
        %v492 = vpop.f32.mrf.mxu0
        %493 = vmatprep.mubr.f32.mxu0 0.0
        %494 = vmatmul.mubr.f32.gmra.mxu0 %v350
        %v495 = vpop.f32.mrf.mxu0
        %v496 = vadd.f32 %v304, %v495
        %v497 = vpop.f32.mrf.mxu0
        %498 = vmatprep.mubr.f32.mxu0 0.0
        %499 = vmatmul.mubr.f32.gmra.mxu0 %v353
        %v500 = vpop.f32.mrf.mxu0
        %v501 = vadd.f32 %v304, %v500
        %v502 = vpop.f32.mrf.mxu0
        %503 = vdwg.mxu0
        %v504 = vmax.f32 %v426, 0.0
        %v505 = vmax.f32 %v431, 0.0
        %v506 = vmax.f32 %v436, 0.0
        %v507 = vmax.f32 %v441, 0.0
        %v508 = vmax.f32 %v446, 0.0
        %v509 = vmax.f32 %v451, 0.0
        %v510 = vmax.f32 %v456, 0.0
        %v511 = vmax.f32 %v461, 0.0
        %v512 = vmax.f32 %v466, 0.0
        %v513 = vmax.f32 %v471, 0.0
        %v514 = vmax.f32 %v476, 0.0
        %v515 = vmax.f32 %v481, 0.0
        %v516 = vmax.f32 %v486, 0.0
        %v517 = vmax.f32 %v491, 0.0
        %v518 = vmax.f32 %v496, 0.0
        %v519 = vmax.f32 %v501, 0.0
        %v520 = vld [vmem:[%s3] sm:$0xff]
        %v521 = vld [vmem:[%s3 + $0x8] sm:$0xff]
        %v522 = vld [vmem:[%s3 + $0x10] sm:$0xff]
        %v523 = vld [vmem:[%s3 + $0x18] sm:$0xff]
        %v524 = vld [vmem:[%s3 + $0x20] sm:$0xff]
        %v525 = vld [vmem:[%s3 + $0x28] sm:$0xff]
        %v526 = vld [vmem:[%s3 + $0x30] sm:$0xff]
        %v527 = vld [vmem:[%s3 + $0x38] sm:$0xff]
        %v528 = vld [vmem:[%s3 + $0x40] sm:$0xff]
        %v529 = vld [vmem:[%s3 + $0x48] sm:$0xff]
        %v530 = vld [vmem:[%s3 + $0x50] sm:$0xff]
        %v531 = vld [vmem:[%s3 + $0x58] sm:$0xff]
        %v532 = vld [vmem:[%s3 + $0x60] sm:$0xff]
        %v533 = vld [vmem:[%s3 + $0x68] sm:$0xff]
        %v534 = vld [vmem:[%s3 + $0x70] sm:$0xff]
        %v535 = vld [vmem:[%s3 + $0x78] sm:$0xff]
        %v536 = vld [vmem:[%s4] sm:$0x1]
        %v538 = vlaneseq
        %v539 = vshrl.u32 %v538, 7
        %v540 = vsub.s32 0, %v539
        %v541 = vrot.slane %v536, %v540
        %543 = vmatprep.subr.mxu0 0.0
        %544 = vmatpush1.msra.mxu0 %v535
        %545 = vmatprep.subr.mxu0 0.0
        %546 = vmatpush1.msra.mxu0 %v534
        %547 = vmatprep.subr.mxu0 0.0
        %548 = vmatpush1.msra.mxu0 %v533
        %549 = vmatprep.subr.mxu0 0.0
        %550 = vmatpush1.msra.mxu0 %v532
        %551 = vmatprep.subr.mxu0 0.0
        %552 = vmatpush1.msra.mxu0 %v531
        %553 = vmatprep.subr.mxu0 0.0
        %554 = vmatpush1.msra.mxu0 %v530
        %555 = vmatprep.subr.mxu0 0.0
        %556 = vmatpush1.msra.mxu0 %v529
        %557 = vmatprep.subr.mxu0 0.0
        %558 = vmatpush1.msra.mxu0 %v528
        %559 = vmatprep.subr.mxu0 0.0
        %560 = vmatpush1.msra.mxu0 %v527
        %561 = vmatprep.subr.mxu0 0.0
        %562 = vmatpush1.msra.mxu0 %v526
        %563 = vmatprep.subr.mxu0 0.0
        %564 = vmatpush1.msra.mxu0 %v525
        %565 = vmatprep.subr.mxu0 0.0
        %566 = vmatpush1.msra.mxu0 %v524
        %567 = vmatprep.subr.mxu0 0.0
        %568 = vmatpush1.msra.mxu0 %v523
        %569 = vmatprep.subr.mxu0 0.0
        %570 = vmatpush1.msra.mxu0 %v522
        %571 = vmatprep.subr.mxu0 0.0
        %572 = vmatpush1.msra.mxu0 %v521
        %573 = vmatprep.subr.mxu0 0.0
        %574 = vmatpush1.msra.mxu0 %v520
        %575 = vmatprep.subr.mxu0 0.0
        %576 = vmatpush2.msra.mxu0 0.0
        %577 = vmatprep.subr.mxu0 0.0
        %578 = vmatpush2.msra.mxu0 0.0
        %579 = vmatprep.subr.mxu0 0.0
        %580 = vmatpush2.msra.mxu0 0.0
        %581 = vmatprep.subr.mxu0 0.0
        %582 = vmatpush2.msra.mxu0 0.0
        %583 = vmatprep.subr.mxu0 0.0
        %584 = vmatpush2.msra.mxu0 0.0
        %585 = vmatprep.subr.mxu0 0.0
        %586 = vmatpush2.msra.mxu0 0.0
        %587 = vmatprep.subr.mxu0 0.0
        %588 = vmatpush2.msra.mxu0 0.0
        %589 = vmatprep.subr.mxu0 0.0
        %590 = vmatpush2.msra.mxu0 0.0
        %591 = vmatprep.subr.mxu0 0.0
        %592 = vmatpush2.msra.mxu0 0.0
        %593 = vmatprep.subr.mxu0 0.0
        %594 = vmatpush2.msra.mxu0 0.0
        %595 = vmatprep.subr.mxu0 0.0
        %596 = vmatpush2.msra.mxu0 0.0
        %597 = vmatprep.subr.mxu0 0.0
        %598 = vmatpush2.msra.mxu0 0.0
        %599 = vmatprep.subr.mxu0 0.0
        %600 = vmatpush2.msra.mxu0 0.0
        %601 = vmatprep.subr.mxu0 0.0
        %602 = vmatpush2.msra.mxu0 0.0
        %603 = vmatprep.subr.mxu0 0.0
        %604 = vmatpush2.msra.mxu0 0.0
        %605 = vmatprep.subr.mxu0 0.0
        %606 = vmatpush2.msra.mxu0 0.0
        %607 = vmatprep.mubr.f32.mxu0 0.0
        %608 = vmatmul.mubr.f32.gmra.mxu0 %v504
        %v609 = vpop.f32.mrf.mxu0
        %v610 = vadd.f32 %v541, %v609
        %v611 = vpop.f32.mrf.mxu0
        %612 = vmatprep.mubr.f32.mxu0 0.0
        %613 = vmatmul.mubr.f32.gmra.mxu0 %v505
        %v614 = vpop.f32.mrf.mxu0
        %v615 = vadd.f32 %v541, %v614
        %v616 = vpop.f32.mrf.mxu0
        %617 = vmatprep.mubr.f32.mxu0 0.0
        %618 = vmatmul.mubr.f32.gmra.mxu0 %v506
        %v619 = vpop.f32.mrf.mxu0
        %v620 = vadd.f32 %v541, %v619
        %v621 = vpop.f32.mrf.mxu0
        %622 = vmatprep.mubr.f32.mxu0 0.0
        %623 = vmatmul.mubr.f32.gmra.mxu0 %v507
        %v624 = vpop.f32.mrf.mxu0
        %v625 = vadd.f32 %v541, %v624
        %v626 = vpop.f32.mrf.mxu0
        %627 = vmatprep.mubr.f32.mxu0 0.0
        %628 = vmatmul.mubr.f32.gmra.mxu0 %v508
        %v629 = vpop.f32.mrf.mxu0
        %v630 = vadd.f32 %v541, %v629
        %v631 = vpop.f32.mrf.mxu0
        %632 = vmatprep.mubr.f32.mxu0 0.0
        %633 = vmatmul.mubr.f32.gmra.mxu0 %v509
        %v634 = vpop.f32.mrf.mxu0
        %v635 = vadd.f32 %v541, %v634
        %v636 = vpop.f32.mrf.mxu0
        %637 = vmatprep.mubr.f32.mxu0 0.0
        %638 = vmatmul.mubr.f32.gmra.mxu0 %v510
        %v639 = vpop.f32.mrf.mxu0
        %v640 = vadd.f32 %v541, %v639
        %v641 = vpop.f32.mrf.mxu0
        %642 = vmatprep.mubr.f32.mxu0 0.0
        %643 = vmatmul.mubr.f32.gmra.mxu0 %v511
        %v644 = vpop.f32.mrf.mxu0
        %v645 = vadd.f32 %v541, %v644
        %v646 = vpop.f32.mrf.mxu0
        %647 = vmatprep.mubr.f32.mxu0 0.0
        %648 = vmatmul.mubr.f32.gmra.mxu0 %v512
        %v649 = vpop.f32.mrf.mxu0
        %v650 = vadd.f32 %v541, %v649
        %v651 = vpop.f32.mrf.mxu0
        %652 = vmatprep.mubr.f32.mxu0 0.0
        %653 = vmatmul.mubr.f32.gmra.mxu0 %v513
        %v654 = vpop.f32.mrf.mxu0
        %v655 = vadd.f32 %v541, %v654
        %v656 = vpop.f32.mrf.mxu0
        %657 = vmatprep.mubr.f32.mxu0 0.0
        %658 = vmatmul.mubr.f32.gmra.mxu0 %v514
        %v659 = vpop.f32.mrf.mxu0
        %v660 = vadd.f32 %v541, %v659
        %v661 = vpop.f32.mrf.mxu0
        %662 = vmatprep.mubr.f32.mxu0 0.0
        %663 = vmatmul.mubr.f32.gmra.mxu0 %v515
        %v664 = vpop.f32.mrf.mxu0
        %v665 = vadd.f32 %v541, %v664
        %v666 = vpop.f32.mrf.mxu0
        %667 = vmatprep.mubr.f32.mxu0 0.0
        %668 = vmatmul.mubr.f32.gmra.mxu0 %v516
        %v669 = vpop.f32.mrf.mxu0
        %v670 = vadd.f32 %v541, %v669
        %v671 = vpop.f32.mrf.mxu0
        %672 = vmatprep.mubr.f32.mxu0 0.0
        %673 = vmatmul.mubr.f32.gmra.mxu0 %v517
        %v674 = vpop.f32.mrf.mxu0
        %v675 = vadd.f32 %v541, %v674
        %v676 = vpop.f32.mrf.mxu0
        %677 = vmatprep.mubr.f32.mxu0 0.0
        %678 = vmatmul.mubr.f32.gmra.mxu0 %v518
        %v679 = vpop.f32.mrf.mxu0
        %v680 = vadd.f32 %v541, %v679
        %v681 = vpop.f32.mrf.mxu0
        %682 = vmatprep.mubr.f32.mxu0 0.0
        %683 = vmatmul.mubr.f32.gmra.mxu0 %v519
        %v684 = vpop.f32.mrf.mxu0
        %v685 = vadd.f32 %v541, %v684
        %v686 = vpop.f32.mrf.mxu0
        %687 = vdwg.mxu0
        %v688 = vmax.f32 %v610, 0.0
        %v689 = vmax.f32 %v615, 0.0
        %v690 = vmax.f32 %v620, 0.0
        %v691 = vmax.f32 %v625, 0.0
        %v692 = vmax.f32 %v630, 0.0
        %v693 = vmax.f32 %v635, 0.0
        %v694 = vmax.f32 %v640, 0.0
        %v695 = vmax.f32 %v645, 0.0
        %v696 = vmax.f32 %v650, 0.0
        %v697 = vmax.f32 %v655, 0.0
        %v698 = vmax.f32 %v660, 0.0
        %v699 = vmax.f32 %v665, 0.0
        %v700 = vmax.f32 %v670, 0.0
        %v701 = vmax.f32 %v675, 0.0
        %v702 = vmax.f32 %v680, 0.0
        %v703 = vmax.f32 %v685, 0.0
        %v704 = vld [vmem:[%s5] sm:$0xff]
        %v705 = vld [vmem:[%s5 + $0x8] sm:$0xff]
        %v706 = vld [vmem:[%s5 + $0x10] sm:$0xff]
        %v707 = vld [vmem:[%s5 + $0x18] sm:$0xff]
        %v708 = vld [vmem:[%s5 + $0x20] sm:$0xff]
        %v709 = vld [vmem:[%s5 + $0x28] sm:$0xff]
        %v710 = vld [vmem:[%s5 + $0x30] sm:$0xff]
        %v711 = vld [vmem:[%s5 + $0x38] sm:$0xff]
        %v712 = vld [vmem:[%s5 + $0x40] sm:$0xff]
        %v713 = vld [vmem:[%s5 + $0x48] sm:$0xff]
        %v714 = vld [vmem:[%s5 + $0x50] sm:$0xff]
        %v715 = vld [vmem:[%s5 + $0x58] sm:$0xff]
        %v716 = vld [vmem:[%s5 + $0x60] sm:$0xff]
        %v717 = vld [vmem:[%s5 + $0x68] sm:$0xff]
        %v718 = vld [vmem:[%s5 + $0x70] sm:$0xff]
        %v719 = vld [vmem:[%s5 + $0x78] sm:$0xff]
        %v720 = vld [vmem:[%s6] sm:$0x1]
        %v722 = vlaneseq
        %v723 = vshrl.u32 %v722, 7
        %v724 = vsub.s32 0, %v723
        %v725 = vrot.slane %v720, %v724
        %727 = vmatprep.subr.mxu0 0.0
        %728 = vmatpush1.msra.mxu0 %v719
        %729 = vmatprep.subr.mxu0 0.0
        %730 = vmatpush1.msra.mxu0 %v718
        %731 = vmatprep.subr.mxu0 0.0
        %732 = vmatpush1.msra.mxu0 %v717
        %733 = vmatprep.subr.mxu0 0.0
        %734 = vmatpush1.msra.mxu0 %v716
        %735 = vmatprep.subr.mxu0 0.0
        %736 = vmatpush1.msra.mxu0 %v715
        %737 = vmatprep.subr.mxu0 0.0
        %738 = vmatpush1.msra.mxu0 %v714
        %739 = vmatprep.subr.mxu0 0.0
        %740 = vmatpush1.msra.mxu0 %v713
        %741 = vmatprep.subr.mxu0 0.0
        %742 = vmatpush1.msra.mxu0 %v712
        %743 = vmatprep.subr.mxu0 0.0
        %744 = vmatpush1.msra.mxu0 %v711
        %745 = vmatprep.subr.mxu0 0.0
        %746 = vmatpush1.msra.mxu0 %v710
        %747 = vmatprep.subr.mxu0 0.0
        %748 = vmatpush1.msra.mxu0 %v709
        %749 = vmatprep.subr.mxu0 0.0
        %750 = vmatpush1.msra.mxu0 %v708
        %751 = vmatprep.subr.mxu0 0.0
        %752 = vmatpush1.msra.mxu0 %v707
        %753 = vmatprep.subr.mxu0 0.0
        %754 = vmatpush1.msra.mxu0 %v706
        %755 = vmatprep.subr.mxu0 0.0
        %756 = vmatpush1.msra.mxu0 %v705
        %757 = vmatprep.subr.mxu0 0.0
        %758 = vmatpush1.msra.mxu0 %v704
        %759 = vmatprep.subr.mxu0 0.0
        %760 = vmatpush2.msra.mxu0 0.0
        %761 = vmatprep.subr.mxu0 0.0
        %762 = vmatpush2.msra.mxu0 0.0
        %763 = vmatprep.subr.mxu0 0.0
        %764 = vmatpush2.msra.mxu0 0.0
        %765 = vmatprep.subr.mxu0 0.0
        %766 = vmatpush2.msra.mxu0 0.0
        %767 = vmatprep.subr.mxu0 0.0
        %768 = vmatpush2.msra.mxu0 0.0
        %769 = vmatprep.subr.mxu0 0.0
        %770 = vmatpush2.msra.mxu0 0.0
        %771 = vmatprep.subr.mxu0 0.0
        %772 = vmatpush2.msra.mxu0 0.0
        %773 = vmatprep.subr.mxu0 0.0
        %774 = vmatpush2.msra.mxu0 0.0
        %775 = vmatprep.subr.mxu0 0.0
        %776 = vmatpush2.msra.mxu0 0.0
        %777 = vmatprep.subr.mxu0 0.0
        %778 = vmatpush2.msra.mxu0 0.0
        %779 = vmatprep.subr.mxu0 0.0
        %780 = vmatpush2.msra.mxu0 0.0
        %781 = vmatprep.subr.mxu0 0.0
        %782 = vmatpush2.msra.mxu0 0.0
        %783 = vmatprep.subr.mxu0 0.0
        %784 = vmatpush2.msra.mxu0 0.0
        %785 = vmatprep.subr.mxu0 0.0
        %786 = vmatpush2.msra.mxu0 0.0
        %787 = vmatprep.subr.mxu0 0.0
        %788 = vmatpush2.msra.mxu0 0.0
        %789 = vmatprep.subr.mxu0 0.0
        %790 = vmatpush2.msra.mxu0 0.0
        %791 = vmatprep.mubr.f32.mxu0 0.0
        %792 = vmatmul.mubr.f32.gmra.mxu0 %v688
        %v793 = vpop.f32.mrf.mxu0
        %v794 = vadd.f32 %v725, %v793
        %v795 = vpop.f32.mrf.mxu0
        %796 = vmatprep.mubr.f32.mxu0 0.0
        %797 = vmatmul.mubr.f32.gmra.mxu0 %v689
        %v798 = vpop.f32.mrf.mxu0
        %v799 = vadd.f32 %v725, %v798
        %v800 = vpop.f32.mrf.mxu0
        %801 = vmatprep.mubr.f32.mxu0 0.0
        %802 = vmatmul.mubr.f32.gmra.mxu0 %v690
        %v803 = vpop.f32.mrf.mxu0
        %v804 = vadd.f32 %v725, %v803
        %v805 = vpop.f32.mrf.mxu0
        %806 = vmatprep.mubr.f32.mxu0 0.0
        %807 = vmatmul.mubr.f32.gmra.mxu0 %v691
        %v808 = vpop.f32.mrf.mxu0
        %v809 = vadd.f32 %v725, %v808
        %v810 = vpop.f32.mrf.mxu0
        %811 = vmatprep.mubr.f32.mxu0 0.0
        %812 = vmatmul.mubr.f32.gmra.mxu0 %v692
        %v813 = vpop.f32.mrf.mxu0
        %v814 = vadd.f32 %v725, %v813
        %v815 = vpop.f32.mrf.mxu0
        %816 = vmatprep.mubr.f32.mxu0 0.0
        %817 = vmatmul.mubr.f32.gmra.mxu0 %v693
        %v818 = vpop.f32.mrf.mxu0
        %v819 = vadd.f32 %v725, %v818
        %v820 = vpop.f32.mrf.mxu0
        %821 = vmatprep.mubr.f32.mxu0 0.0
        %822 = vmatmul.mubr.f32.gmra.mxu0 %v694
        %v823 = vpop.f32.mrf.mxu0
        %v824 = vadd.f32 %v725, %v823
        %v825 = vpop.f32.mrf.mxu0
        %826 = vmatprep.mubr.f32.mxu0 0.0
        %827 = vmatmul.mubr.f32.gmra.mxu0 %v695
        %v828 = vpop.f32.mrf.mxu0
        %v829 = vadd.f32 %v725, %v828
        %v830 = vpop.f32.mrf.mxu0
        %831 = vmatprep.mubr.f32.mxu0 0.0
        %832 = vmatmul.mubr.f32.gmra.mxu0 %v696
        %v833 = vpop.f32.mrf.mxu0
        %v834 = vadd.f32 %v725, %v833
        %v835 = vpop.f32.mrf.mxu0
        %836 = vmatprep.mubr.f32.mxu0 0.0
        %837 = vmatmul.mubr.f32.gmra.mxu0 %v697
        %v838 = vpop.f32.mrf.mxu0
        %v839 = vadd.f32 %v725, %v838
        %v840 = vpop.f32.mrf.mxu0
        %841 = vmatprep.mubr.f32.mxu0 0.0
        %842 = vmatmul.mubr.f32.gmra.mxu0 %v698
        %v843 = vpop.f32.mrf.mxu0
        %v844 = vadd.f32 %v725, %v843
        %v845 = vpop.f32.mrf.mxu0
        %846 = vmatprep.mubr.f32.mxu0 0.0
        %847 = vmatmul.mubr.f32.gmra.mxu0 %v699
        %v848 = vpop.f32.mrf.mxu0
        %v849 = vadd.f32 %v725, %v848
        %v850 = vpop.f32.mrf.mxu0
        %851 = vmatprep.mubr.f32.mxu0 0.0
        %852 = vmatmul.mubr.f32.gmra.mxu0 %v700
        %v853 = vpop.f32.mrf.mxu0
        %v854 = vadd.f32 %v725, %v853
        %v855 = vpop.f32.mrf.mxu0
        %856 = vmatprep.mubr.f32.mxu0 0.0
        %857 = vmatmul.mubr.f32.gmra.mxu0 %v701
        %v858 = vpop.f32.mrf.mxu0
        %v859 = vadd.f32 %v725, %v858
        %v860 = vpop.f32.mrf.mxu0
        %861 = vmatprep.mubr.f32.mxu0 0.0
        %862 = vmatmul.mubr.f32.gmra.mxu0 %v702
        %v863 = vpop.f32.mrf.mxu0
        %v864 = vadd.f32 %v725, %v863
        %v865 = vpop.f32.mrf.mxu0
        %866 = vmatprep.mubr.f32.mxu0 0.0
        %867 = vmatmul.mubr.f32.gmra.mxu0 %v703
        %v868 = vpop.f32.mrf.mxu0
        %v869 = vadd.f32 %v725, %v868
        %v870 = vpop.f32.mrf.mxu0
        %871 = vdwg.mxu0
        %872 = vst [vmem:[%s272] sm:$0xff] %v794
        %873 = vst [vmem:[%s272 + $0x8] sm:$0xff] %v799
        %874 = vst [vmem:[%s272 + $0x10] sm:$0xff] %v804
        %875 = vst [vmem:[%s272 + $0x18] sm:$0xff] %v809
        %876 = vst [vmem:[%s272 + $0x20] sm:$0xff] %v814
        %877 = vst [vmem:[%s272 + $0x28] sm:$0xff] %v819
        %878 = vst [vmem:[%s272 + $0x30] sm:$0xff] %v824
        %879 = vst [vmem:[%s272 + $0x38] sm:$0xff] %v829
        %880 = vst [vmem:[%s272 + $0x40] sm:$0xff] %v834
        %881 = vst [vmem:[%s272 + $0x48] sm:$0xff] %v839
        %882 = vst [vmem:[%s272 + $0x50] sm:$0xff] %v844
        %883 = vst [vmem:[%s272 + $0x58] sm:$0xff] %v849
        %884 = vst [vmem:[%s272 + $0x60] sm:$0xff] %v854
        %885 = vst [vmem:[%s272 + $0x68] sm:$0xff] %v859
        %886 = vst [vmem:[%s272 + $0x70] sm:$0xff] %v864
        %887 = vst [vmem:[%s272 + $0x78] sm:$0xff] %v869
        %s888 = sand.u32 %s181, 1
        %s889 = scalar_lea.sflag [#allocation3], %s888
        %s890 = sand.u32 %s181, 1
        %s891 = smul.addr %s890, 128
        %s892 = scalar_lea.vmem [#allocation2], %s891
        // Predicated region
        $region49: #{tpu_custom_call.1} parent=47 // pred_check
          %p893 = pneg %p191
        $region50: #{tpu_custom_call.1} parent=47 // pred_check_branch
          %895 = sbr.rel (%p893) target = $region52
        $region51: #{tpu_custom_call.1} parent=47 // pred_region
          %s896 = smul.u32 16, %s21
          %s898 = ssub.s32 2048, 2048
          %899 = vsyncadd %s889, %s898
          %s900 = smul.addr %s896, 128
          %s901 = scalar_lea.hbm %s7, %s900
          %s902 = sshll.u32 %s892, 4
          %s903 = int_to_ptr.vmem [resolvable:$true] %s902
          %908 = dma.vmem_to_hbm [thread:$0]  %s903, 2048, %s901, %s889, 128, 128, 8
        $region52: #{tpu_custom_call.1} parent=47 // pred_fallthru
          _
      $region48: #{tpu_custom_call.1} parent=5 // pred_fallthru
        _
      %p909 = scmp.le.s32.totalorder 2, %s16
      // Predicated region
      $region53: #{tpu_custom_call.1} parent=5 // pred_check
        %p910 = pneg %p909
      $region54: #{tpu_custom_call.1} parent=5 // pred_check_branch
        %912 = sbr.rel (%p910) target = $region56
      $region55: #{tpu_custom_call.1} parent=5 // pred_region
        %s913 = ssub.s32 %s16, 2
        // Predicated region
        $region57: #{tpu_custom_call.1} parent=55 // pred_check
          %p914 = pneg %p197
        $region58: #{tpu_custom_call.1} parent=55 // pred_check_branch
          %916 = sbr.rel (%p914) target = $region60
        $region59: #{tpu_custom_call.1} parent=55 // pred_region
          %s917 = sand.u32 %s182, 1
          %s918 = scalar_lea.sflag [#allocation3], %s917
          %s919 = sand.u32 %s182, 1
          %s920 = smul.addr %s919, 128
          %s921 = scalar_lea.vmem [#allocation2], %s920
          %922 = dma.done %s918, 2048
        $region60: #{tpu_custom_call.1} parent=55 // pred_fallthru
          _
      $region56: #{tpu_custom_call.1} parent=5 // pred_fallthru
        _
    $region6: #{tpu_custom_call.1} parent=1 // loop_footer
      %s20 = sadd.s32 1, %s16
    $region7: #{tpu_custom_call.1} parent=1 // loop_footer_branch
      %15 = sbr.rel target = $region3
    $region8: #{tpu_custom_call.1} parent=1 // loop_exit
      _
    %923 = vsyncpa [#allocation3], 1
    %s924 = scalar_lea.sflag [#allocation3], 1
    %925 = vsyncpa %s924, 1

</llo_original>
